<compile_context>
chip_gen: v5e
topology: v5e:2x2
jax: 0.10.0
libtpu: 0.0.40
codegen_flags: <defaults>
</compile_context>

<pallas_src>
import jax
import jax.numpy as jnp
from jax.experimental import pallas as pl
from jax.experimental.pallas import tpu as pltpu

INPUT_SIZE = 196                                   # 14 * 14
PIPE_DIMS = [196, 300, 100, 70, 30, 20, 10]        # 6 Linear layers per pipe
CLS_DIMS = [20, 30, 20, 10, 2]                     # 4 Linear layers
N_PIPE = len(PIPE_DIMS) - 1                        # 6
N_CLS = len(CLS_DIMS) - 1                          # 4
N_LAYERS = N_PIPE + N_CLS                          # 10

MAIN_OFF = 32      # lane offset of the classifier output inside the out slab
IN_LANES = 2 * INPUT_SIZE                          # 392
IN_LANES_PAD = 512                                 # layer-0 K padded to 4*128


def _rup(v, m):
    return ((v + m - 1) // m) * m


def _cdiv(a, b):
    return -(-a // b)


# ----- fused-network layout (computed once, all static Python ints) --------
# Fused network = 6 block-diagonal "double pipe" layers + 4 classifier layers.
FUSED_OUT = [2 * PIPE_DIMS[i + 1] for i in range(N_PIPE)] + CLS_DIMS[1:]

# Lane-padded widths: each activation width is a multiple of 128 and each
# layer's padded input width equals the previous layer's padded output width.
OUT_PAD = [_rup(o, 128) for o in FUSED_OUT]        # [640,256,256,128,...,128]
IN_PAD = [IN_LANES_PAD] + OUT_PAD[:-1]             # [512,640,256,256,128,...]

# Weight slabs grouped by padded output (lane) width.
LANE_WIDTHS = sorted(set(OUT_PAD), reverse=True)   # [640, 256, 128]
_rows = {w: 0 for w in LANE_WIDTHS}
LAYOUT = []                                        # per layer: (slab_id, row_off)
for _li in range(N_LAYERS):
    _lw = OUT_PAD[_li]
    LAYOUT.append((LANE_WIDTHS.index(_lw), _rows[_lw]))
    _rows[_lw] += IN_PAD[_li]
SLAB_SHAPES = [(_rows[w], w) for w in LANE_WIDTHS]  # [(512,640),(896,256),(1024,128)]
BIAS_SHAPE = (16, LANE_WIDTHS[0])                   # one bias row per layer
# Column offset of each layer's live output columns inside its padded width:
# the final classifier layer is shifted to lanes [32:34] so it can be packed
# into the same output slab as the pipe outputs (lanes [0:20]).
COL_OFF = [0] * (N_LAYERS - 1) + [MAIN_OFF]


# ----------------------------- kernel ---------------------------------------
def _dfc_kernel(x_ref, w640_ref, w256_ref, w128_ref, b_ref, out_ref, xpad_ref):
    slabs = (w640_ref, w256_ref, w128_ref)

    # Build a fully aligned (TB, 512) layer-0 LHS: real input in lanes 0:392,
    # zeros in 392:512 (matching slab0's zero rows), then cast to bf16.
    xpad_ref[...] = jnp.zeros_like(xpad_ref)
    xpad_ref[:, 0:IN_LANES] = x_ref[...]
    h = xpad_ref[...]                                # f32 (TB, 512)

    pipe_out = None
    for li in range(N_LAYERS):
        sid, roff = LAYOUT[li]
        w = slabs[sid][roff:roff + IN_PAD[li], :]    # static, aligned bf16 slice
        b = b_ref[li:li + 1, 0:OUT_PAD[li]]          # (1, out_p) f32
        h = jnp.dot(h.astype(jnp.bfloat16), w,
                    preferred_element_type=jnp.float32) + b
        if li != N_PIPE - 1 and li != N_LAYERS - 1:  # ReLU between layers only
            h = jnp.maximum(h, 0.0)
        if li == N_PIPE - 1:                         # end of the two pipes
            pipe_out = h                             # lanes 0:10=x1, 10:20=x2

    # pipe_out lanes 20:128 are exactly zero, final h is zero outside 32:34,
    # so a single add packs both results into one lane-dense (TB,128) slab.
    out_ref[...] = pipe_out + h


# --------------------------- parameter setup --------------------------------
def _init_linear(key, fan_in, fan_out):
    """PyTorch nn.Linear default init: U(-1/sqrt(fan_in), 1/sqrt(fan_in))."""
    kw, kb = jax.random.split(key)
    bound = 1.0 / (fan_in ** 0.5)
    w = jax.random.uniform(kw, (fan_in, fan_out), jnp.float32, -bound, bound)
    b = jax.random.uniform(kb, (fan_out,), jnp.float32, -bound, bound)
    return w, b


def init_params(key, weight_sharing=False):
    keys = jax.random.split(key, 2 * N_PIPE + N_CLS)
    idx = 0

    def stack(dims):
        nonlocal idx
        layers = []
        for i in range(len(dims) - 1):
            layers.append(_init_linear(keys[idx], dims[i], dims[i + 1]))
            idx += 1
        return layers

    pipe1 = stack(PIPE_DIMS)
    if weight_sharing:
        pipe2 = pipe1
        idx += N_PIPE
    else:
        pipe2 = stack(PIPE_DIMS)
    classifier = stack(CLS_DIMS)
    return pipe1, pipe2, classifier


def pack_params(pipe1, pipe2, classifier):
    """Pack per-layer (W, b) into 3 lane-dense bf16 weight slabs + 1 f32 bias slab."""
    fused = []
    for (w1, b1), (w2, b2) in zip(pipe1, pipe2):     # block-diagonal pipes
        din, dout = w1.shape
        w = jnp.zeros((2 * din, 2 * dout), jnp.float32)
        w = w.at[:din, :dout].set(w1)
        w = w.at[din:, dout:].set(w2)
        fused.append((w, jnp.concatenate([b1, b2], axis=0)))
    fused.extend(classifier)

    slabs = [jnp.zeros(s, jnp.bfloat16) for s in SLAB_SHAPES]
    biases = jnp.zeros(BIAS_SHAPE, jnp.float32)
    for li, (w, b) in enumerate(fused):
        sid, roff = LAYOUT[li]
        coff = COL_OFF[li]
        it, ot = w.shape
        slabs[sid] = slabs[sid].at[roff:roff + it,
                                   coff:coff + ot].set(w.astype(jnp.bfloat16))
        biases = biases.at[li, coff:coff + ot].set(b)
    return slabs[0], slabs[1], slabs[2], biases


# ------------------------------ forward -------------------------------------
@jax.jit
def deep_fc_forward(x, w640, w256, w128, biases):
    """x: (B, 2, 14, 14) f32 -> (x_main (B,2), (x1_pipe (B,10), x2_pipe (B,10)))."""
    B = x.shape[0]
    # Row-major reshape gives [channel0 flat | channel1 flat] per row,
    # which is exactly the block-diagonal network's input layout.
    x_cat = x.reshape(B, IN_LANES)

    # Balanced batch tiles: cap the tile at 512 rows, force >=2 grid steps when
    # there is enough work so both v7x TensorCores are fed, keep TB a multiple
    # of 16 (bf16 sublane tile).
    TB_MAX = 512
    n_tiles = max(1, _cdiv(B, TB_MAX))
    if B > 16:
        n_tiles = max(n_tiles, 2)
    TB = _rup(_cdiv(B, n_tiles), 16)
    B_pad = n_tiles * TB
    if B_pad != B:
        # TODO(synk): for very large odd B, pre-pad the batch upstream once to
        # avoid this extra HBM pass (padding here is at most 16*n_tiles rows).
        x_cat = jnp.pad(x_cat, ((0, B_pad - B), (0, 0)))

    batched = lambda i: (i, 0)
    const = lambda i: (0, 0)                          # weights stay resident

    out = pl.pallas_call(
        _dfc_kernel,
        grid=(n_tiles,),
        in_specs=[
            pl.BlockSpec((TB, IN_LANES), batched),         # inputs stream (f32)
            pl.BlockSpec(SLAB_SHAPES[0], const),           # weight slab 640 (bf16)
            pl.BlockSpec(SLAB_SHAPES[1], const),           # weight slab 256 (bf16)
            pl.BlockSpec(SLAB_SHAPES[2], const),           # weight slab 128 (bf16)
            pl.BlockSpec(BIAS_SHAPE, const),               # bias slab (f32)
        ],
        out_specs=pl.BlockSpec((TB, 128), batched),        # single packed output
        out_shape=jax.ShapeDtypeStruct((B_pad, 128), jnp.float32),
        scratch_shapes=[pltpu.VMEM((TB, IN_LANES_PAD), jnp.float32)],
        compiler_params=pltpu.CompilerParams(
            dimension_semantics=("parallel",)),
    )(x_cat, w640, w256, w128, biases)

    x1_pipe = out[:B, 0:PIPE_DIMS[-1]]
    x2_pipe = out[:B, PIPE_DIMS[-1]:2 * PIPE_DIMS[-1]]
    x_main = out[:B, MAIN_OFF:MAIN_OFF + CLS_DIMS[-1]]
    return x_main, (x1_pipe, x2_pipe)


# ------------------------------- main ---------------------------------------
if __name__ == "__main__":
    key = jax.random.PRNGKey(0)
    k_params, k_x = jax.random.split(key)

    pipe1, pipe2, classifier = init_params(k_params, weight_sharing=False)
    w640, w256, w128, biases = pack_params(pipe1, pipe2, classifier)

    B = 2
    x = jax.random.normal(k_x, (B, 2, 14, 14), dtype=jnp.float32)

    x_main, (x1_pipe, x2_pipe) = deep_fc_forward(x, w640, w256, w128, biases)
    jax.block_until_ready((x_main, x1_pipe, x2_pipe))

    assert x_main.shape == (B, 2)
    assert x1_pipe.shape == (B, 10)
    assert x2_pipe.shape == (B, 10)

    # Reference A: exact emulation of the kernel math (bf16 weights/activations,
    # f32 accumulation) with the original unfused parameters.
    def ref_mlp_bf16(xin, layers):
        n = len(layers)
        for i, (w, b) in enumerate(layers):
            xin = jnp.dot(xin.astype(jnp.bfloat16), w.astype(jnp.bfloat16),
                          preferred_element_type=jnp.float32) + b
            if i < n - 1:
                xin = jnp.maximum(xin, 0.0)
        return xin

    # Reference B: original pure-f32 module math (loose tol: bf16 weight quant).
    def ref_mlp_f32(xin, layers):
        n = len(layers)
        for i, (w, b) in enumerate(layers):
            xin = xin @ w + b
            if i < n - 1:
                xin = jnp.maximum(xin, 0.0)
        return xin

    x1f = x[:, 0].reshape(B, INPUT_SIZE)
    x2f = x[:, 1].reshape(B, INPUT_SIZE)

    r1 = ref_mlp_bf16(x1f, pipe1)
    r2 = ref_mlp_bf16(x2f, pipe2)
    rm = ref_mlp_bf16(jnp.concatenate([r1, r2], axis=1), classifier)
    assert jnp.allclose(x1_pipe, r1, atol=1e-3, rtol=1e-3)
    assert jnp.allclose(x2_pipe, r2, atol=1e-3, rtol=1e-3)
    assert jnp.allclose(x_main, rm, atol=1e-3, rtol=1e-3)

    f1 = ref_mlp_f32(x1f, pipe1)
    f2 = ref_mlp_f32(x2f, pipe2)
    fm = ref_mlp_f32(jnp.concatenate([f1, f2], axis=1), classifier)
    assert jnp.allclose(x1_pipe, f1, atol=1e-1, rtol=1e-1)
    assert jnp.allclose(x2_pipe, f2, atol=1e-1, rtol=1e-1)
    assert jnp.allclose(x_main, fm, atol=1e-1, rtol=1e-1)

    print("KERNEL_OK")
</pallas_src>

<mosaic_0001>
module attributes {stable_mosaic.version = 11 : i64} {
  func.func @_dfc_kernel(%arg0: i32, %arg1: memref<16x392xf32, #tpu.memory_space<vmem>>, %arg2: memref<512x640xbf16, #tpu.memory_space<vmem>>, %arg3: memref<896x256xbf16, #tpu.memory_space<vmem>>, %arg4: memref<1024x128xbf16, #tpu.memory_space<vmem>>, %arg5: memref<16x640xf32, #tpu.memory_space<vmem>>, %arg6: memref<16x128xf32, #tpu.memory_space<vmem>>, %arg7: memref<16x512xf32, #tpu.memory_space<vmem>>) attributes {dimension_semantics = [#tpu.dimension_semantics<parallel>], iteration_bounds = array<i64: 1>, scalar_prefetch = 0 : i64, scratch_operands = 1 : i64, tpu.core_type = #tpu.core_type<tc>, window_params = [{transform_indices = @transform_0, window_bounds = array<i64: 16, 392>}, {pipeline_mode = #tpu.pipeline_mode<synchronous>, transform_indices = @transform_1, window_bounds = array<i64: 512, 640>}, {pipeline_mode = #tpu.pipeline_mode<synchronous>, transform_indices = @transform_2, window_bounds = array<i64: 896, 256>}, {pipeline_mode = #tpu.pipeline_mode<synchronous>, transform_indices = @transform_3, window_bounds = array<i64: 1024, 128>}, {pipeline_mode = #tpu.pipeline_mode<synchronous>, transform_indices = @transform_4, window_bounds = array<i64: 16, 640>}, {transform_indices = @transform_5, window_bounds = array<i64: 16, 128>}]} {
    %cst = arith.constant 0.000000e+00 : f32
    %0 = vector.broadcast %cst : f32 to vector<16x512xf32>
    %c0 = arith.constant 0 : index
    %c0_0 = arith.constant 0 : index
    %1 = vector.load %arg7[%c0, %c0_0] : memref<16x512xf32, #tpu.memory_space<vmem>>, vector<16x512xf32>
    tpu.vector_store %arg7[%c0, %c0_0], %0 {strides = array<i32>} : memref<16x512xf32, #tpu.memory_space<vmem>>, vector<16x512xf32>,
    %c0_1 = arith.constant 0 : index
    %c0_2 = arith.constant 0 : index
    %2 = vector.load %arg1[%c0_1, %c0_2] : memref<16x392xf32, #tpu.memory_space<vmem>>, vector<16x392xf32>
    %c0_3 = arith.constant 0 : index
    %c0_4 = arith.constant 0 : index
    %3 = vector.load %arg7[%c0_3, %c0_4] : memref<16x512xf32, #tpu.memory_space<vmem>>, vector<16x392xf32>
    tpu.vector_store %arg7[%c0_3, %c0_4], %2 {strides = array<i32>} : memref<16x512xf32, #tpu.memory_space<vmem>>, vector<16x392xf32>,
    %c0_5 = arith.constant 0 : index
    %c0_6 = arith.constant 0 : index
    %4 = vector.load %arg7[%c0_5, %c0_6] : memref<16x512xf32, #tpu.memory_space<vmem>>, vector<16x512xf32>
    %c0_7 = arith.constant 0 : index
    %c0_8 = arith.constant 0 : index
    %5 = vector.load %arg2[%c0_7, %c0_8] : memref<512x640xbf16, #tpu.memory_space<vmem>>, vector<512x640xbf16>
    %c0_9 = arith.constant 0 : index
    %c0_10 = arith.constant 0 : index
    %6 = vector.load %arg5[%c0_9, %c0_10] : memref<16x640xf32, #tpu.memory_space<vmem>>, vector<1x640xf32>
    %7 = arith.truncf %4 : vector<16x512xf32> to vector<16x512xbf16>
    %cst_11 = arith.constant dense<0.000000e+00> : vector<16x640xf32>
    %8 = tpu.matmul %7, %5, %cst_11 {dimension_numbers = #tpu.dot_dimension_numbers<[1], [0], [0], [1], [0, 0, 1, 1], [], []>} : vector<16x512xbf16>, vector<512x640xbf16>, vector<16x640xf32> -> vector<16x640xf32>
    %9 = vector.broadcast %6 : vector<1x640xf32> to vector<16x640xf32>
    %10 = arith.addf %8, %9 : vector<16x640xf32>
    %cst_12 = arith.constant 0.000000e+00 : f32
    %11 = vector.broadcast %cst_12 : f32 to vector<16x640xf32>
    %12 = arith.maximumf %10, %11 : vector<16x640xf32>
    %c0_13 = arith.constant 0 : index
    %c0_14 = arith.constant 0 : index
    %13 = vector.load %arg3[%c0_13, %c0_14] : memref<896x256xbf16, #tpu.memory_space<vmem>>, vector<640x256xbf16>
    %c1 = arith.constant 1 : index
    %c0_15 = arith.constant 0 : index
    %14 = vector.load %arg5[%c1, %c0_15] : memref<16x640xf32, #tpu.memory_space<vmem>>, vector<1x256xf32>
    %15 = arith.truncf %12 : vector<16x640xf32> to vector<16x640xbf16>
    %cst_16 = arith.constant dense<0.000000e+00> : vector<16x256xf32>
    %16 = tpu.matmul %15, %13, %cst_16 {dimension_numbers = #tpu.dot_dimension_numbers<[1], [0], [0], [1], [0, 0, 1, 1], [], []>} : vector<16x640xbf16>, vector<640x256xbf16>, vector<16x256xf32> -> vector<16x256xf32>
    %17 = vector.broadcast %14 : vector<1x256xf32> to vector<16x256xf32>
    %18 = arith.addf %16, %17 : vector<16x256xf32>
    %cst_17 = arith.constant 0.000000e+00 : f32
    %19 = vector.broadcast %cst_17 : f32 to vector<16x256xf32>
    %20 = arith.maximumf %18, %19 : vector<16x256xf32>
    %c640 = arith.constant 640 : index
    %c0_18 = arith.constant 0 : index
    %21 = vector.load %arg3[%c640, %c0_18] : memref<896x256xbf16, #tpu.memory_space<vmem>>, vector<256x256xbf16>
    %c2 = arith.constant 2 : index
    %c0_19 = arith.constant 0 : index
    %22 = vector.load %arg5[%c2, %c0_19] : memref<16x640xf32, #tpu.memory_space<vmem>>, vector<1x256xf32>
    %23 = arith.truncf %20 : vector<16x256xf32> to vector<16x256xbf16>
    %cst_20 = arith.constant dense<0.000000e+00> : vector<16x256xf32>
    %24 = tpu.matmul %23, %21, %cst_20 {dimension_numbers = #tpu.dot_dimension_numbers<[1], [0], [0], [1], [0, 0, 1, 1], [], []>} : vector<16x256xbf16>, vector<256x256xbf16>, vector<16x256xf32> -> vector<16x256xf32>
    %25 = vector.broadcast %22 : vector<1x256xf32> to vector<16x256xf32>
    %26 = arith.addf %24, %25 : vector<16x256xf32>
    %cst_21 = arith.constant 0.000000e+00 : f32
    %27 = vector.broadcast %cst_21 : f32 to vector<16x256xf32>
    %28 = arith.maximumf %26, %27 : vector<16x256xf32>
    %c0_22 = arith.constant 0 : index
    %c0_23 = arith.constant 0 : index
    %29 = vector.load %arg4[%c0_22, %c0_23] : memref<1024x128xbf16, #tpu.memory_space<vmem>>, vector<256x128xbf16>
    %c3 = arith.constant 3 : index
    %c0_24 = arith.constant 0 : index
    %30 = vector.load %arg5[%c3, %c0_24] : memref<16x640xf32, #tpu.memory_space<vmem>>, vector<1x128xf32>
    %31 = arith.truncf %28 : vector<16x256xf32> to vector<16x256xbf16>
    %cst_25 = arith.constant dense<0.000000e+00> : vector<16x128xf32>
    %32 = tpu.matmul %31, %29, %cst_25 {dimension_numbers = #tpu.dot_dimension_numbers<[1], [0], [0], [1], [0, 0, 1, 1], [], []>} : vector<16x256xbf16>, vector<256x128xbf16>, vector<16x128xf32> -> vector<16x128xf32>
    %33 = vector.broadcast %30 : vector<1x128xf32> to vector<16x128xf32>
    %34 = arith.addf %32, %33 : vector<16x128xf32>
    %cst_26 = arith.constant 0.000000e+00 : f32
    %35 = vector.broadcast %cst_26 : f32 to vector<16x128xf32>
    %36 = arith.maximumf %34, %35 : vector<16x128xf32>
    %c256 = arith.constant 256 : index
    %c0_27 = arith.constant 0 : index
    %37 = vector.load %arg4[%c256, %c0_27] : memref<1024x128xbf16, #tpu.memory_space<vmem>>, vector<128x128xbf16>
    %c4 = arith.constant 4 : index
    %c0_28 = arith.constant 0 : index
    %38 = vector.load %arg5[%c4, %c0_28] : memref<16x640xf32, #tpu.memory_space<vmem>>, vector<1x128xf32>
    %39 = arith.truncf %36 : vector<16x128xf32> to vector<16x128xbf16>
    %cst_29 = arith.constant dense<0.000000e+00> : vector<16x128xf32>
    %40 = tpu.matmul %39, %37, %cst_29 {dimension_numbers = #tpu.dot_dimension_numbers<[1], [0], [0], [1], [0, 0, 1, 1], [], []>} : vector<16x128xbf16>, vector<128x128xbf16>, vector<16x128xf32> -> vector<16x128xf32>
    %41 = vector.broadcast %38 : vector<1x128xf32> to vector<16x128xf32>
    %42 = arith.addf %40, %41 : vector<16x128xf32>
    %cst_30 = arith.constant 0.000000e+00 : f32
    %43 = vector.broadcast %cst_30 : f32 to vector<16x128xf32>
    %44 = arith.maximumf %42, %43 : vector<16x128xf32>
    %c384 = arith.constant 384 : index
    %c0_31 = arith.constant 0 : index
    %45 = vector.load %arg4[%c384, %c0_31] : memref<1024x128xbf16, #tpu.memory_space<vmem>>, vector<128x128xbf16>
    %c5 = arith.constant 5 : index
    %c0_32 = arith.constant 0 : index
    %46 = vector.load %arg5[%c5, %c0_32] : memref<16x640xf32, #tpu.memory_space<vmem>>, vector<1x128xf32>
    %47 = arith.truncf %44 : vector<16x128xf32> to vector<16x128xbf16>
    %cst_33 = arith.constant dense<0.000000e+00> : vector<16x128xf32>
    %48 = tpu.matmul %47, %45, %cst_33 {dimension_numbers = #tpu.dot_dimension_numbers<[1], [0], [0], [1], [0, 0, 1, 1], [], []>} : vector<16x128xbf16>, vector<128x128xbf16>, vector<16x128xf32> -> vector<16x128xf32>
    %49 = vector.broadcast %46 : vector<1x128xf32> to vector<16x128xf32>
    %50 = arith.addf %48, %49 : vector<16x128xf32>
    %c512 = arith.constant 512 : index
    %c0_34 = arith.constant 0 : index
    %51 = vector.load %arg4[%c512, %c0_34] : memref<1024x128xbf16, #tpu.memory_space<vmem>>, vector<128x128xbf16>
    %c6 = arith.constant 6 : index
    %c0_35 = arith.constant 0 : index
    %52 = vector.load %arg5[%c6, %c0_35] : memref<16x640xf32, #tpu.memory_space<vmem>>, vector<1x128xf32>
    %53 = arith.truncf %50 : vector<16x128xf32> to vector<16x128xbf16>
    %cst_36 = arith.constant dense<0.000000e+00> : vector<16x128xf32>
    %54 = tpu.matmul %53, %51, %cst_36 {dimension_numbers = #tpu.dot_dimension_numbers<[1], [0], [0], [1], [0, 0, 1, 1], [], []>} : vector<16x128xbf16>, vector<128x128xbf16>, vector<16x128xf32> -> vector<16x128xf32>
    %55 = vector.broadcast %52 : vector<1x128xf32> to vector<16x128xf32>
    %56 = arith.addf %54, %55 : vector<16x128xf32>
    %cst_37 = arith.constant 0.000000e+00 : f32
    %57 = vector.broadcast %cst_37 : f32 to vector<16x128xf32>
    %58 = arith.maximumf %56, %57 : vector<16x128xf32>
    %c640_38 = arith.constant 640 : index
    %c0_39 = arith.constant 0 : index
    %59 = vector.load %arg4[%c640_38, %c0_39] : memref<1024x128xbf16, #tpu.memory_space<vmem>>, vector<128x128xbf16>
    %c7 = arith.constant 7 : index
    %c0_40 = arith.constant 0 : index
    %60 = vector.load %arg5[%c7, %c0_40] : memref<16x640xf32, #tpu.memory_space<vmem>>, vector<1x128xf32>
    %61 = arith.truncf %58 : vector<16x128xf32> to vector<16x128xbf16>
    %cst_41 = arith.constant dense<0.000000e+00> : vector<16x128xf32>
    %62 = tpu.matmul %61, %59, %cst_41 {dimension_numbers = #tpu.dot_dimension_numbers<[1], [0], [0], [1], [0, 0, 1, 1], [], []>} : vector<16x128xbf16>, vector<128x128xbf16>, vector<16x128xf32> -> vector<16x128xf32>
    %63 = vector.broadcast %60 : vector<1x128xf32> to vector<16x128xf32>
    %64 = arith.addf %62, %63 : vector<16x128xf32>
    %cst_42 = arith.constant 0.000000e+00 : f32
    %65 = vector.broadcast %cst_42 : f32 to vector<16x128xf32>
    %66 = arith.maximumf %64, %65 : vector<16x128xf32>
    %c768 = arith.constant 768 : index
    %c0_43 = arith.constant 0 : index
    %67 = vector.load %arg4[%c768, %c0_43] : memref<1024x128xbf16, #tpu.memory_space<vmem>>, vector<128x128xbf16>
    %c8 = arith.constant 8 : index
    %c0_44 = arith.constant 0 : index
    %68 = vector.load %arg5[%c8, %c0_44] : memref<16x640xf32, #tpu.memory_space<vmem>>, vector<1x128xf32>
    %69 = arith.truncf %66 : vector<16x128xf32> to vector<16x128xbf16>
    %cst_45 = arith.constant dense<0.000000e+00> : vector<16x128xf32>
    %70 = tpu.matmul %69, %67, %cst_45 {dimension_numbers = #tpu.dot_dimension_numbers<[1], [0], [0], [1], [0, 0, 1, 1], [], []>} : vector<16x128xbf16>, vector<128x128xbf16>, vector<16x128xf32> -> vector<16x128xf32>
    %71 = vector.broadcast %68 : vector<1x128xf32> to vector<16x128xf32>
    %72 = arith.addf %70, %71 : vector<16x128xf32>
    %cst_46 = arith.constant 0.000000e+00 : f32
    %73 = vector.broadcast %cst_46 : f32 to vector<16x128xf32>
    %74 = arith.maximumf %72, %73 : vector<16x128xf32>
    %c896 = arith.constant 896 : index
    %c0_47 = arith.constant 0 : index
    %75 = vector.load %arg4[%c896, %c0_47] : memref<1024x128xbf16, #tpu.memory_space<vmem>>, vector<128x128xbf16>
    %c9 = arith.constant 9 : index
    %c0_48 = arith.constant 0 : index
    %76 = vector.load %arg5[%c9, %c0_48] : memref<16x640xf32, #tpu.memory_space<vmem>>, vector<1x128xf32>
    %77 = arith.truncf %74 : vector<16x128xf32> to vector<16x128xbf16>
    %cst_49 = arith.constant dense<0.000000e+00> : vector<16x128xf32>
    %78 = tpu.matmul %77, %75, %cst_49 {dimension_numbers = #tpu.dot_dimension_numbers<[1], [0], [0], [1], [0, 0, 1, 1], [], []>} : vector<16x128xbf16>, vector<128x128xbf16>, vector<16x128xf32> -> vector<16x128xf32>
    %79 = vector.broadcast %76 : vector<1x128xf32> to vector<16x128xf32>
    %80 = arith.addf %78, %79 : vector<16x128xf32>
    %81 = arith.addf %50, %80 : vector<16x128xf32>
    %c0_50 = arith.constant 0 : index
    %c0_51 = arith.constant 0 : index
    %82 = vector.load %arg6[%c0_50, %c0_51] : memref<16x128xf32, #tpu.memory_space<vmem>>, vector<16x128xf32>
    tpu.vector_store %arg6[%c0_50, %c0_51], %81 {strides = array<i32>} : memref<16x128xf32, #tpu.memory_space<vmem>>, vector<16x128xf32>,
    return
  }
  func.func @transform_0(%arg0: i32) -> (i32, i32) {
    %c0_i32 = arith.constant 0 : i32
    %c0_i32_0 = arith.constant 0 : i32
    return %arg0, %c0_i32 : i32, i32
  }
  func.func @transform_1(%arg0: i32) -> (i32, i32) {
    %c0_i32 = arith.constant 0 : i32
    %c0_i32_0 = arith.constant 0 : i32
    %c0_i32_1 = arith.constant 0 : i32
    return %c0_i32, %c0_i32_0 : i32, i32
  }
  func.func @transform_2(%arg0: i32) -> (i32, i32) {
    %c0_i32 = arith.constant 0 : i32
    %c0_i32_0 = arith.constant 0 : i32
    %c0_i32_1 = arith.constant 0 : i32
    return %c0_i32, %c0_i32_0 : i32, i32
  }
  func.func @transform_3(%arg0: i32) -> (i32, i32) {
    %c0_i32 = arith.constant 0 : i32
    %c0_i32_0 = arith.constant 0 : i32
    %c0_i32_1 = arith.constant 0 : i32
    return %c0_i32, %c0_i32_0 : i32, i32
  }
  func.func @transform_4(%arg0: i32) -> (i32, i32) {
    %c0_i32 = arith.constant 0 : i32
    %c0_i32_0 = arith.constant 0 : i32
    %c0_i32_1 = arith.constant 0 : i32
    return %c0_i32, %c0_i32_0 : i32, i32
  }
  func.func @transform_5(%arg0: i32) -> (i32, i32) {
    %c0_i32 = arith.constant 0 : i32
    %c0_i32_0 = arith.constant 0 : i32
    return %arg0, %c0_i32 : i32, i32
  }
}

</mosaic_0001>

<llo_original>
// kernel: deep_fc_forward.1
$region0: #{deep_fc_forward.1}
  #allocation0 [shape = 'u32[]', space=smem, size = 0x4, offset = 0x4, fixed_abs, tag = 'smem constant byte address 0x4 - core index']
  #allocation1 [shape = 'u32[72,128]{1,0:T(1,128)}', space=vmem, size = 0x9000, scoped, tag = 'internal scratch']
  #allocation2 [shape = 'f32[16,512]{1,0:T(8,128)}', space=vmem, size = 0x8000, scoped, tag = 'scratch operand']
  %s0 = inlined_call_operand.vmem [shape: f32[16,392], index: 0, kind: input, shape index: {}]
  %s1 = inlined_call_operand.hbm [shape: bf16[512,640], index: 1, kind: input, shape index: {}]
  %s2 = inlined_call_operand.hbm [shape: bf16[896,256], index: 2, kind: input, shape index: {}]
  %s3 = inlined_call_operand.hbm [shape: bf16[1024,128], index: 3, kind: input, shape index: {}]
  %s4 = inlined_call_operand.vmem [shape: f32[16,640], index: 4, kind: input, shape index: {}]
  %s5 = inlined_call_operand.vmem [shape: f32[16,128], index: 5, kind: output, shape index: {}]
  %s6 = sld [smem:[#allocation0]]
  $region42: #{deep_fc_forward.1} parent=0
    _
  %s8 = ssub.s32 1, %s6
  %s9 = scalar_select 0, %s8, %s6
  $region1: #{deep_fc_forward.1} parent=0
    #allocation3 [shape = 'u8[655360]{0}', space=vmem, size = 0xa0000, scoped, tag = 'input window, operand 1, single buffered']
    #allocation4 [shape = 's32[1]{0}', space=sflag, size = 0x4, scoped, tag = 'scoped memory for deep_fc_forward.1']
    #allocation5 [shape = 'u8[458752]{0}', space=vmem, size = 0x70000, scoped, tag = 'input window, operand 2, single buffered']
    #allocation6 [shape = 's32[1]{0}', space=sflag, size = 0x4, scoped, tag = 'scoped memory for deep_fc_forward.1']
    #allocation7 [shape = 'u8[262144]{0}', space=vmem, size = 0x40000, scoped, tag = 'input window, operand 3, single buffered']
    %10 = vsyncpa [#allocation4], 0
    %11 = vsyncpa [#allocation6], 0
    // Predicated region
    $region2: #{deep_fc_forward.1} parent=1 // pred_check
      _
    $region3: #{deep_fc_forward.1} parent=1 // pred_check_branch
      %13 = sbr.rel (0) target = $region5
    $region4: #{deep_fc_forward.1} parent=1 // pred_region
      _
    $region5: #{deep_fc_forward.1} parent=1 // pred_fallthru
      _
    // Predicated region
    $region6: #{deep_fc_forward.1} parent=1 // pred_check
      _
    $region7: #{deep_fc_forward.1} parent=1 // pred_check_branch
      %15 = sbr.rel (0) target = $region9
    $region8: #{deep_fc_forward.1} parent=1 // pred_region
      %17 = vsyncadd [#allocation4], 0
      %s18 = sshll.u32 %s1, 4
      %s19 = int_to_ptr.hbm [resolvable:$true] %s18
      %s20 = sshll.u32 [#allocation3], 4
      %s21 = int_to_ptr.vmem [resolvable:$true] %s20
      %26 = dma.hbm_to_vmem [thread:$0]  %s19, 20480, %s21, [#allocation4], 320, 320, 20
    $region9: #{deep_fc_forward.1} parent=1 // pred_fallthru
      _
    // Predicated region
    $region10: #{deep_fc_forward.1} parent=1 // pred_check
      _
    $region11: #{deep_fc_forward.1} parent=1 // pred_check_branch
      %28 = sbr.rel (0) target = $region13
    $region12: #{deep_fc_forward.1} parent=1 // pred_region
      %30 = vsyncadd [#allocation6], 0
      %s31 = sshll.u32 %s2, 4
      %s32 = int_to_ptr.hbm [resolvable:$true] %s31
      %s33 = sshll.u32 [#allocation5], 4
      %s34 = int_to_ptr.vmem [resolvable:$true] %s33
      %39 = dma.hbm_to_vmem [thread:$0]  %s32, 14336, %s34, [#allocation6], 128, 128, 8
    $region13: #{deep_fc_forward.1} parent=1 // pred_fallthru
      _
    // Predicated region
    $region14: #{deep_fc_forward.1} parent=1 // pred_check
      _
    $region15: #{deep_fc_forward.1} parent=1 // pred_check_branch
      %41 = sbr.rel (0) target = $region17
    $region16: #{deep_fc_forward.1} parent=1 // pred_region
      %43 = vsyncadd [#allocation6], 0
      %s44 = sshll.u32 %s3, 4
      %s45 = int_to_ptr.hbm [resolvable:$true] %s44
      %s46 = sshll.u32 [#allocation7], 4
      %s47 = int_to_ptr.vmem [resolvable:$true] %s46
      %52 = dma.hbm_to_vmem [thread:$0]  %s45, 8192, %s47, [#allocation6], 64, 64, 4
    $region17: #{deep_fc_forward.1} parent=1 // pred_fallthru
      _
    // Predicated region
    $region18: #{deep_fc_forward.1} parent=1 // pred_check
      _
    $region19: #{deep_fc_forward.1} parent=1 // pred_check_branch
      %54 = sbr.rel (0) target = $region21
    $region20: #{deep_fc_forward.1} parent=1 // pred_region
      _
    $region21: #{deep_fc_forward.1} parent=1 // pred_fallthru
      _
    // Predicated region
    $region22: #{deep_fc_forward.1} parent=1 // pred_check
      _
    $region23: #{deep_fc_forward.1} parent=1 // pred_check_branch
      %56 = sbr.rel (0) target = $region25
    $region24: #{deep_fc_forward.1} parent=1 // pred_region
      %58 = dma.done [#allocation4], 20480
    $region25: #{deep_fc_forward.1} parent=1 // pred_fallthru
      _
    // Predicated region
    $region26: #{deep_fc_forward.1} parent=1 // pred_check
      _
    $region27: #{deep_fc_forward.1} parent=1 // pred_check_branch
      %60 = sbr.rel (0) target = $region29
    $region28: #{deep_fc_forward.1} parent=1 // pred_region
      %62 = dma.done [#allocation6], 14336
    $region29: #{deep_fc_forward.1} parent=1 // pred_fallthru
      _
    // Predicated region
    $region30: #{deep_fc_forward.1} parent=1 // pred_check
      _
    $region31: #{deep_fc_forward.1} parent=1 // pred_check_branch
      %64 = sbr.rel (0) target = $region33
    $region32: #{deep_fc_forward.1} parent=1 // pred_region
      %66 = dma.done [#allocation6], 8192
    $region33: #{deep_fc_forward.1} parent=1 // pred_fallthru
      _
    %67 = vst [vmem:[#allocation2] sm:$0xff] 0.0
    %68 = vst [vmem:[#allocation2 + $0x8] sm:$0xff] 0.0
    %69 = vst [vmem:[#allocation2 + $0x10] sm:$0xff] 0.0
    %70 = vst [vmem:[#allocation2 + $0x18] sm:$0xff] 0.0
    %71 = vst [vmem:[#allocation2 + $0x20] sm:$0xff] 0.0
    %72 = vst [vmem:[#allocation2 + $0x28] sm:$0xff] 0.0
    %73 = vst [vmem:[#allocation2 + $0x30] sm:$0xff] 0.0
    %74 = vst [vmem:[#allocation2 + $0x38] sm:$0xff] 0.0
    %v75 = vld [vmem:[%s0] sm:$0xff]
    %v76 = vld [vmem:[%s0 + $0x8] sm:$0xff]
    %v77 = vld [vmem:[%s0 + $0x10] sm:$0xff]
    %v78 = vld [vmem:[%s0 + $0x18] sm:$0xff]
    %v79 = vld [vmem:[%s0 + $0x20] sm:$0xff]
    %v80 = vld [vmem:[%s0 + $0x28] sm:$0xff]
    %v81 = vld [vmem:[%s0 + $0x30] sm:$0xff]
    %v82 = vld [vmem:[%s0 + $0x38] sm:$0xff]
    %83 = vst [vmem:[#allocation2] sm:$0xff] %v75
    %84 = vst [vmem:[#allocation2 + $0x8] sm:$0xff] %v76
    %85 = vst [vmem:[#allocation2 + $0x10] sm:$0xff] %v77
    %vm86 = vcmask 64512
    %87 = vst.msk [vmem:[#allocation2 + $0x18] sm:$0xff] %vm86, %v78
    %88 = vst [vmem:[#allocation2 + $0x20] sm:$0xff] %v79
    %89 = vst [vmem:[#allocation2 + $0x28] sm:$0xff] %v80
    %90 = vst [vmem:[#allocation2 + $0x30] sm:$0xff] %v81
    %91 = vst.msk [vmem:[#allocation2 + $0x38] sm:$0xff] %vm86, %v82
    %v92 = vld [vmem:[#allocation2] sm:$0xff]
    %v93 = vld [vmem:[#allocation2 + $0x8] sm:$0xff]
    %v94 = vld [vmem:[#allocation2 + $0x10] sm:$0xff]
    %v95 = vld [vmem:[#allocation2 + $0x18] sm:$0xff]
    %v96 = vld [vmem:[#allocation2 + $0x20] sm:$0xff]
    %v97 = vld [vmem:[#allocation2 + $0x28] sm:$0xff]
    %v98 = vld [vmem:[#allocation2 + $0x30] sm:$0xff]
    %v99 = vld [vmem:[#allocation2 + $0x38] sm:$0xff]
    %v100 = vld [vmem:[#allocation3] sm:$0xff]
    %v101 = vld [vmem:[#allocation3 + $0x8] sm:$0xff]
    %v102 = vld [vmem:[#allocation3 + $0x10] sm:$0xf]
    %v103 = vld [vmem:[#allocation3 + $0x14] sm:$0xff]
    %v104 = vld [vmem:[#allocation3 + $0x1c] sm:$0xff]
    %v105 = vld [vmem:[#allocation3 + $0x24] sm:$0xf]
    %v106 = vld [vmem:[#allocation3 + $0x28] sm:$0xff]
    %v107 = vld [vmem:[#allocation3 + $0x30] sm:$0xff]
    %v108 = vld [vmem:[#allocation3 + $0x38] sm:$0xf]
    %v109 = vld [vmem:[#allocation3 + $0x3c] sm:$0xff]
    %v110 = vld [vmem:[#allocation3 + $0x44] sm:$0xff]
    %v111 = vld [vmem:[#allocation3 + $0x4c] sm:$0xf]
    %v112 = vld [vmem:[#allocation3 + $0x50] sm:$0xff]
    %v113 = vld [vmem:[#allocation3 + $0x58] sm:$0xff]
    %v114 = vld [vmem:[#allocation3 + $0x60] sm:$0xf]
    %v115 = vld [vmem:[#allocation3 + $0x64] sm:$0xff]
    %v116 = vld [vmem:[#allocation3 + $0x6c] sm:$0xff]
    %v117 = vld [vmem:[#allocation3 + $0x74] sm:$0xf]
    %v118 = vld [vmem:[#allocation3 + $0x78] sm:$0xff]
    %v119 = vld [vmem:[#allocation3 + $0x80] sm:$0xff]
    %v120 = vld [vmem:[#allocation3 + $0x88] sm:$0xf]
    %v121 = vld [vmem:[#allocation3 + $0x8c] sm:$0xff]
    %v122 = vld [vmem:[#allocation3 + $0x94] sm:$0xff]
    %v123 = vld [vmem:[#allocation3 + $0x9c] sm:$0xf]
    %v124 = vld [vmem:[#allocation3 + $0xa0] sm:$0xff]
    %v125 = vld [vmem:[#allocation3 + $0xa8] sm:$0xff]
    %v126 = vld [vmem:[#allocation3 + $0xb0] sm:$0xf]
    %v127 = vld [vmem:[#allocation3 + $0xb4] sm:$0xff]
    %v128 = vld [vmem:[#allocation3 + $0xbc] sm:$0xff]
    %v129 = vld [vmem:[#allocation3 + $0xc4] sm:$0xf]
    %v130 = vld [vmem:[#allocation3 + $0xc8] sm:$0xff]
    %v131 = vld [vmem:[#allocation3 + $0xd0] sm:$0xff]
    %v132 = vld [vmem:[#allocation3 + $0xd8] sm:$0xf]
    %v133 = vld [vmem:[#allocation3 + $0xdc] sm:$0xff]
    %v134 = vld [vmem:[#allocation3 + $0xe4] sm:$0xff]
    %v135 = vld [vmem:[#allocation3 + $0xec] sm:$0xf]
    %v136 = vld [vmem:[#allocation3 + $0xf0] sm:$0xff]
    %v137 = vld [vmem:[#allocation3 + $0xf8] sm:$0xff]
    %v138 = vld [vmem:[#allocation3 + $0x100] sm:$0xf]
    %v139 = vld [vmem:[#allocation3 + $0x104] sm:$0xff]
    %v140 = vld [vmem:[#allocation3 + $0x10c] sm:$0xff]
    %v141 = vld [vmem:[#allocation3 + $0x114] sm:$0xf]
    %v142 = vld [vmem:[#allocation3 + $0x118] sm:$0xff]
    %v143 = vld [vmem:[#allocation3 + $0x120] sm:$0xff]
    %v144 = vld [vmem:[#allocation3 + $0x128] sm:$0xf]
    %v145 = vld [vmem:[#allocation3 + $0x12c] sm:$0xff]
    %v146 = vld [vmem:[#allocation3 + $0x134] sm:$0xff]
    %v147 = vld [vmem:[#allocation3 + $0x13c] sm:$0xf]
    %v148 = vld [vmem:[#allocation3 + $0x140] sm:$0xff]
    %v149 = vld [vmem:[#allocation3 + $0x148] sm:$0xff]
    %v150 = vld [vmem:[#allocation3 + $0x150] sm:$0xf]
    %v151 = vld [vmem:[#allocation3 + $0x154] sm:$0xff]
    %v152 = vld [vmem:[#allocation3 + $0x15c] sm:$0xff]
    %v153 = vld [vmem:[#allocation3 + $0x164] sm:$0xf]
    %v154 = vld [vmem:[#allocation3 + $0x168] sm:$0xff]
    %v155 = vld [vmem:[#allocation3 + $0x170] sm:$0xff]
    %v156 = vld [vmem:[#allocation3 + $0x178] sm:$0xf]
    %v157 = vld [vmem:[#allocation3 + $0x17c] sm:$0xff]
    %v158 = vld [vmem:[#allocation3 + $0x184] sm:$0xff]
    %v159 = vld [vmem:[#allocation3 + $0x18c] sm:$0xf]
    %v160 = vld [vmem:[#allocation3 + $0x190] sm:$0xff]
    %v161 = vld [vmem:[#allocation3 + $0x198] sm:$0xff]
    %v162 = vld [vmem:[#allocation3 + $0x1a0] sm:$0xf]
    %v163 = vld [vmem:[#allocation3 + $0x1a4] sm:$0xff]
    %v164 = vld [vmem:[#allocation3 + $0x1ac] sm:$0xff]
    %v165 = vld [vmem:[#allocation3 + $0x1b4] sm:$0xf]
    %v166 = vld [vmem:[#allocation3 + $0x1b8] sm:$0xff]
    %v167 = vld [vmem:[#allocation3 + $0x1c0] sm:$0xff]
    %v168 = vld [vmem:[#allocation3 + $0x1c8] sm:$0xf]
    %v169 = vld [vmem:[#allocation3 + $0x1cc] sm:$0xff]
    %v170 = vld [vmem:[#allocation3 + $0x1d4] sm:$0xff]
    %v171 = vld [vmem:[#allocation3 + $0x1dc] sm:$0xf]
    %v172 = vld [vmem:[#allocation3 + $0x1e0] sm:$0xff]
    %v173 = vld [vmem:[#allocation3 + $0x1e8] sm:$0xff]
    %v174 = vld [vmem:[#allocation3 + $0x1f0] sm:$0xf]
    %v175 = vld [vmem:[#allocation3 + $0x1f4] sm:$0xff]
    %v176 = vld [vmem:[#allocation3 + $0x1fc] sm:$0xff]
    %v177 = vld [vmem:[#allocation3 + $0x204] sm:$0xf]
    %v178 = vld [vmem:[#allocation3 + $0x208] sm:$0xff]
    %v179 = vld [vmem:[#allocation3 + $0x210] sm:$0xff]
    %v180 = vld [vmem:[#allocation3 + $0x218] sm:$0xf]
    %v181 = vld [vmem:[#allocation3 + $0x21c] sm:$0xff]
    %v182 = vld [vmem:[#allocation3 + $0x224] sm:$0xff]
    %v183 = vld [vmem:[#allocation3 + $0x22c] sm:$0xf]
    %v184 = vld [vmem:[#allocation3 + $0x230] sm:$0xff]
    %v185 = vld [vmem:[#allocation3 + $0x238] sm:$0xff]
    %v186 = vld [vmem:[#allocation3 + $0x240] sm:$0xf]
    %v187 = vld [vmem:[#allocation3 + $0x244] sm:$0xff]
    %v188 = vld [vmem:[#allocation3 + $0x24c] sm:$0xff]
    %v189 = vld [vmem:[#allocation3 + $0x254] sm:$0xf]
    %v190 = vld [vmem:[#allocation3 + $0x258] sm:$0xff]
    %v191 = vld [vmem:[#allocation3 + $0x260] sm:$0xff]
    %v192 = vld [vmem:[#allocation3 + $0x268] sm:$0xf]
    %v193 = vld [vmem:[#allocation3 + $0x26c] sm:$0xff]
    %v194 = vld [vmem:[#allocation3 + $0x274] sm:$0xff]
    %v195 = vld [vmem:[#allocation3 + $0x27c] sm:$0xf]
    %v196 = vld [vmem:[#allocation3 + $0x280] sm:$0xff]
    %v197 = vld [vmem:[#allocation3 + $0x288] sm:$0xff]
    %v198 = vld [vmem:[#allocation3 + $0x290] sm:$0xf]
    %v199 = vld [vmem:[#allocation3 + $0x294] sm:$0xff]
    %v200 = vld [vmem:[#allocation3 + $0x29c] sm:$0xff]
    %v201 = vld [vmem:[#allocation3 + $0x2a4] sm:$0xf]
    %v202 = vld [vmem:[#allocation3 + $0x2a8] sm:$0xff]
    %v203 = vld [vmem:[#allocation3 + $0x2b0] sm:$0xff]
    %v204 = vld [vmem:[#allocation3 + $0x2b8] sm:$0xf]
    %v205 = vld [vmem:[#allocation3 + $0x2bc] sm:$0xff]
    %v206 = vld [vmem:[#allocation3 + $0x2c4] sm:$0xff]
    %v207 = vld [vmem:[#allocation3 + $0x2cc] sm:$0xf]
    %v208 = vld [vmem:[#allocation3 + $0x2d0] sm:$0xff]
    %v209 = vld [vmem:[#allocation3 + $0x2d8] sm:$0xff]
    %v210 = vld [vmem:[#allocation3 + $0x2e0] sm:$0xf]
    %v211 = vld [vmem:[#allocation3 + $0x2e4] sm:$0xff]
    %v212 = vld [vmem:[#allocation3 + $0x2ec] sm:$0xff]
    %v213 = vld [vmem:[#allocation3 + $0x2f4] sm:$0xf]
    %v214 = vld [vmem:[#allocation3 + $0x2f8] sm:$0xff]
    %v215 = vld [vmem:[#allocation3 + $0x300] sm:$0xff]
    %v216 = vld [vmem:[#allocation3 + $0x308] sm:$0xf]
    %v217 = vld [vmem:[#allocation3 + $0x30c] sm:$0xff]
    %v218 = vld [vmem:[#allocation3 + $0x314] sm:$0xff]
    %v219 = vld [vmem:[#allocation3 + $0x31c] sm:$0xf]
    %v220 = vld [vmem:[#allocation3 + $0x320] sm:$0xff]
    %v221 = vld [vmem:[#allocation3 + $0x328] sm:$0xff]
    %v222 = vld [vmem:[#allocation3 + $0x330] sm:$0xf]
    %v223 = vld [vmem:[#allocation3 + $0x334] sm:$0xff]
    %v224 = vld [vmem:[#allocation3 + $0x33c] sm:$0xff]
    %v225 = vld [vmem:[#allocation3 + $0x344] sm:$0xf]
    %v226 = vld [vmem:[#allocation3 + $0x348] sm:$0xff]
    %v227 = vld [vmem:[#allocation3 + $0x350] sm:$0xff]
    %v228 = vld [vmem:[#allocation3 + $0x358] sm:$0xf]
    %v229 = vld [vmem:[#allocation3 + $0x35c] sm:$0xff]
    %v230 = vld [vmem:[#allocation3 + $0x364] sm:$0xff]
    %v231 = vld [vmem:[#allocation3 + $0x36c] sm:$0xf]
    %v232 = vld [vmem:[#allocation3 + $0x370] sm:$0xff]
    %v233 = vld [vmem:[#allocation3 + $0x378] sm:$0xff]
    %v234 = vld [vmem:[#allocation3 + $0x380] sm:$0xf]
    %v235 = vld [vmem:[#allocation3 + $0x384] sm:$0xff]
    %v236 = vld [vmem:[#allocation3 + $0x38c] sm:$0xff]
    %v237 = vld [vmem:[#allocation3 + $0x394] sm:$0xf]
    %v238 = vld [vmem:[#allocation3 + $0x398] sm:$0xff]
    %v239 = vld [vmem:[#allocation3 + $0x3a0] sm:$0xff]
    %v240 = vld [vmem:[#allocation3 + $0x3a8] sm:$0xf]
    %v241 = vld [vmem:[#allocation3 + $0x3ac] sm:$0xff]
    %v242 = vld [vmem:[#allocation3 + $0x3b4] sm:$0xff]
    %v243 = vld [vmem:[#allocation3 + $0x3bc] sm:$0xf]
    %v244 = vld [vmem:[#allocation3 + $0x3c0] sm:$0xff]
    %v245 = vld [vmem:[#allocation3 + $0x3c8] sm:$0xff]
    %v246 = vld [vmem:[#allocation3 + $0x3d0] sm:$0xf]
    %v247 = vld [vmem:[#allocation3 + $0x3d4] sm:$0xff]
    %v248 = vld [vmem:[#allocation3 + $0x3dc] sm:$0xff]
    %v249 = vld [vmem:[#allocation3 + $0x3e4] sm:$0xf]
    %v250 = vld [vmem:[#allocation3 + $0x3e8] sm:$0xff]
    %v251 = vld [vmem:[#allocation3 + $0x3f0] sm:$0xff]
    %v252 = vld [vmem:[#allocation3 + $0x3f8] sm:$0xf]
    %v253 = vld [vmem:[#allocation3 + $0x3fc] sm:$0xff]
    %v254 = vld [vmem:[#allocation3 + $0x404] sm:$0xff]
    %v255 = vld [vmem:[#allocation3 + $0x40c] sm:$0xf]
    %v256 = vld [vmem:[#allocation3 + $0x410] sm:$0xff]
    %v257 = vld [vmem:[#allocation3 + $0x418] sm:$0xff]
    %v258 = vld [vmem:[#allocation3 + $0x420] sm:$0xf]
    %v259 = vld [vmem:[#allocation3 + $0x424] sm:$0xff]
    %v260 = vld [vmem:[#allocation3 + $0x42c] sm:$0xff]
    %v261 = vld [vmem:[#allocation3 + $0x434] sm:$0xf]
    %v262 = vld [vmem:[#allocation3 + $0x438] sm:$0xff]
    %v263 = vld [vmem:[#allocation3 + $0x440] sm:$0xff]
    %v264 = vld [vmem:[#allocation3 + $0x448] sm:$0xf]
    %v265 = vld [vmem:[#allocation3 + $0x44c] sm:$0xff]
    %v266 = vld [vmem:[#allocation3 + $0x454] sm:$0xff]
    %v267 = vld [vmem:[#allocation3 + $0x45c] sm:$0xf]
    %v268 = vld [vmem:[#allocation3 + $0x460] sm:$0xff]
    %v269 = vld [vmem:[#allocation3 + $0x468] sm:$0xff]
    %v270 = vld [vmem:[#allocation3 + $0x470] sm:$0xf]
    %v271 = vld [vmem:[#allocation3 + $0x474] sm:$0xff]
    %v272 = vld [vmem:[#allocation3 + $0x47c] sm:$0xff]
    %v273 = vld [vmem:[#allocation3 + $0x484] sm:$0xf]
    %v274 = vld [vmem:[#allocation3 + $0x488] sm:$0xff]
    %v275 = vld [vmem:[#allocation3 + $0x490] sm:$0xff]
    %v276 = vld [vmem:[#allocation3 + $0x498] sm:$0xf]
    %v277 = vld [vmem:[#allocation3 + $0x49c] sm:$0xff]
    %v278 = vld [vmem:[#allocation3 + $0x4a4] sm:$0xff]
    %v279 = vld [vmem:[#allocation3 + $0x4ac] sm:$0xf]
    %v280 = vld [vmem:[#allocation3 + $0x4b0] sm:$0xff]
    %v281 = vld [vmem:[#allocation3 + $0x4b8] sm:$0xff]
    %v282 = vld [vmem:[#allocation3 + $0x4c0] sm:$0xf]
    %v283 = vld [vmem:[#allocation3 + $0x4c4] sm:$0xff]
    %v284 = vld [vmem:[#allocation3 + $0x4cc] sm:$0xff]
    %v285 = vld [vmem:[#allocation3 + $0x4d4] sm:$0xf]
    %v286 = vld [vmem:[#allocation3 + $0x4d8] sm:$0xff]
    %v287 = vld [vmem:[#allocation3 + $0x4e0] sm:$0xff]
    %v288 = vld [vmem:[#allocation3 + $0x4e8] sm:$0xf]
    %v289 = vld [vmem:[#allocation3 + $0x4ec] sm:$0xff]
    %v290 = vld [vmem:[#allocation3 + $0x4f4] sm:$0xff]
    %v291 = vld [vmem:[#allocation3 + $0x4fc] sm:$0xf]
    %v292 = vld [vmem:[%s4] ss:$8 sm:$0xf]
    %v293 = vld [vmem:[%s4] ss:$8 sm:$0x10]
    %v294 = vor.u32 %v292, %v293
    %v295 = vpack.c.bf16 %v96, %v92
    %v296 = vpack.c.bf16 %v97, %v93
    %v297 = vpack.c.bf16 %v98, %v94
    %v298 = vpack.c.bf16 %v99, %v95
    %v300 = vperm.slane %v294, 0
    %v301 = vperm.slane %v294, 1
    %v302 = vperm.slane %v294, 2
    %v303 = vperm.slane %v294, 3
    %v304 = vperm.slane %v294, 4
    %v502 = vunpack.c.l.b16 %v100
    %v503 = vunpack.c.h.b16 %v100
    %v504 = vunpack.c.l.b16 %v101
    %v505 = vunpack.c.h.b16 %v101
    %v506 = vunpack.c.l.b16 %v102
    %v507 = vunpack.c.l.b16 %v103
    %v508 = vunpack.c.h.b16 %v103
    %v509 = vunpack.c.l.b16 %v104
    %v510 = vunpack.c.h.b16 %v104
    %v511 = vunpack.c.l.b16 %v105
    %v512 = vunpack.c.l.b16 %v106
    %v513 = vunpack.c.h.b16 %v106
    %v514 = vunpack.c.l.b16 %v107
    %v515 = vunpack.c.h.b16 %v107
    %v516 = vunpack.c.l.b16 %v108
    %v517 = vunpack.c.l.b16 %v109
    %v518 = vunpack.c.h.b16 %v109
    %v519 = vunpack.c.l.b16 %v110
    %v520 = vunpack.c.h.b16 %v110
    %v521 = vunpack.c.l.b16 %v111
    %v522 = vunpack.c.l.b16 %v112
    %v523 = vunpack.c.h.b16 %v112
    %v524 = vunpack.c.l.b16 %v113
    %v525 = vunpack.c.h.b16 %v113
    %v526 = vunpack.c.l.b16 %v114
    %v527 = vunpack.c.l.b16 %v115
    %v528 = vunpack.c.h.b16 %v115
    %v529 = vunpack.c.l.b16 %v116
    %v530 = vunpack.c.h.b16 %v116
    %v531 = vunpack.c.l.b16 %v117
    %v532 = vunpack.c.l.b16 %v118
    %v533 = vunpack.c.h.b16 %v118
    %v534 = vunpack.c.l.b16 %v119
    %v535 = vunpack.c.h.b16 %v119
    %v536 = vunpack.c.l.b16 %v120
    %v537 = vunpack.c.l.b16 %v121
    %v538 = vunpack.c.h.b16 %v121
    %v539 = vunpack.c.l.b16 %v122
    %v540 = vunpack.c.h.b16 %v122
    %v541 = vunpack.c.l.b16 %v123
    %v542 = vunpack.c.l.b16 %v124
    %v543 = vunpack.c.h.b16 %v124
    %v544 = vunpack.c.l.b16 %v125
    %v545 = vunpack.c.h.b16 %v125
    %v546 = vunpack.c.l.b16 %v126
    %v547 = vunpack.c.l.b16 %v127
    %v548 = vunpack.c.h.b16 %v127
    %v549 = vunpack.c.l.b16 %v128
    %v550 = vunpack.c.h.b16 %v128
    %v551 = vunpack.c.l.b16 %v129
    %v552 = vunpack.c.l.b16 %v130
    %v553 = vunpack.c.h.b16 %v130
    %v554 = vunpack.c.l.b16 %v131
    %v555 = vunpack.c.h.b16 %v131
    %v556 = vunpack.c.l.b16 %v132
    %v557 = vunpack.c.l.b16 %v133
    %v558 = vunpack.c.h.b16 %v133
    %v559 = vunpack.c.l.b16 %v134
    %v560 = vunpack.c.h.b16 %v134
    %v561 = vunpack.c.l.b16 %v135
    %v562 = vunpack.c.l.b16 %v136
    %v563 = vunpack.c.h.b16 %v136
    %v564 = vunpack.c.l.b16 %v137
    %v565 = vunpack.c.h.b16 %v137
    %v566 = vunpack.c.l.b16 %v138
    %v567 = vunpack.c.l.b16 %v139
    %v568 = vunpack.c.h.b16 %v139
    %v569 = vunpack.c.l.b16 %v140
    %v570 = vunpack.c.h.b16 %v140
    %v571 = vunpack.c.l.b16 %v141
    %v572 = vunpack.c.l.b16 %v142
    %v573 = vunpack.c.h.b16 %v142
    %v574 = vunpack.c.l.b16 %v143
    %v575 = vunpack.c.h.b16 %v143
    %v576 = vunpack.c.l.b16 %v144
    %v577 = vunpack.c.l.b16 %v145
    %v578 = vunpack.c.h.b16 %v145
    %v579 = vunpack.c.l.b16 %v146
    %v580 = vunpack.c.h.b16 %v146
    %v581 = vunpack.c.l.b16 %v147
    %v582 = vunpack.c.l.b16 %v148
    %v583 = vunpack.c.h.b16 %v148
    %v584 = vunpack.c.l.b16 %v149
    %v585 = vunpack.c.h.b16 %v149
    %v586 = vunpack.c.l.b16 %v150
    %v587 = vunpack.c.l.b16 %v151
    %v588 = vunpack.c.h.b16 %v151
    %v589 = vunpack.c.l.b16 %v152
    %v590 = vunpack.c.h.b16 %v152
    %v591 = vunpack.c.l.b16 %v153
    %v592 = vunpack.c.l.b16 %v154
    %v593 = vunpack.c.h.b16 %v154
    %v594 = vunpack.c.l.b16 %v155
    %v595 = vunpack.c.h.b16 %v155
    %v596 = vunpack.c.l.b16 %v156
    %v597 = vunpack.c.l.b16 %v157
    %v598 = vunpack.c.h.b16 %v157
    %v599 = vunpack.c.l.b16 %v158
    %v600 = vunpack.c.h.b16 %v158
    %v601 = vunpack.c.l.b16 %v159
    %v602 = vunpack.c.l.b16 %v160
    %v603 = vunpack.c.h.b16 %v160
    %v604 = vunpack.c.l.b16 %v161
    %v605 = vunpack.c.h.b16 %v161
    %v606 = vunpack.c.l.b16 %v162
    %v607 = vunpack.c.l.b16 %v163
    %v608 = vunpack.c.h.b16 %v163
    %v609 = vunpack.c.l.b16 %v164
    %v610 = vunpack.c.h.b16 %v164
    %v611 = vunpack.c.l.b16 %v165
    %v612 = vunpack.c.l.b16 %v166
    %v613 = vunpack.c.h.b16 %v166
    %v614 = vunpack.c.l.b16 %v167
    %v615 = vunpack.c.h.b16 %v167
    %v616 = vunpack.c.l.b16 %v168
    %v617 = vunpack.c.l.b16 %v169
    %v618 = vunpack.c.h.b16 %v169
    %v619 = vunpack.c.l.b16 %v170
    %v620 = vunpack.c.h.b16 %v170
    %v621 = vunpack.c.l.b16 %v171
    %v622 = vunpack.c.l.b16 %v172
    %v623 = vunpack.c.h.b16 %v172
    %v624 = vunpack.c.l.b16 %v173
    %v625 = vunpack.c.h.b16 %v173
    %v626 = vunpack.c.l.b16 %v174
    %v627 = vunpack.c.l.b16 %v175
    %v628 = vunpack.c.h.b16 %v175
    %v629 = vunpack.c.l.b16 %v176
    %v630 = vunpack.c.h.b16 %v176
    %v631 = vunpack.c.l.b16 %v177
    %v632 = vunpack.c.l.b16 %v178
    %v633 = vunpack.c.h.b16 %v178
    %v634 = vunpack.c.l.b16 %v179
    %v635 = vunpack.c.h.b16 %v179
    %v636 = vunpack.c.l.b16 %v180
    %v637 = vunpack.c.l.b16 %v181
    %v638 = vunpack.c.h.b16 %v181
    %v639 = vunpack.c.l.b16 %v182
    %v640 = vunpack.c.h.b16 %v182
    %v641 = vunpack.c.l.b16 %v183
    %v642 = vunpack.c.l.b16 %v184
    %v643 = vunpack.c.h.b16 %v184
    %v644 = vunpack.c.l.b16 %v185
    %v645 = vunpack.c.h.b16 %v185
    %v646 = vunpack.c.l.b16 %v186
    %v647 = vunpack.c.l.b16 %v187
    %v648 = vunpack.c.h.b16 %v187
    %v649 = vunpack.c.l.b16 %v188
    %v650 = vunpack.c.h.b16 %v188
    %v651 = vunpack.c.l.b16 %v189
    %v652 = vunpack.c.l.b16 %v190
    %v653 = vunpack.c.h.b16 %v190
    %v654 = vunpack.c.l.b16 %v191
    %v655 = vunpack.c.h.b16 %v191
    %v656 = vunpack.c.l.b16 %v192
    %v657 = vunpack.c.l.b16 %v193
    %v658 = vunpack.c.h.b16 %v193
    %v659 = vunpack.c.l.b16 %v194
    %v660 = vunpack.c.h.b16 %v194
    %v661 = vunpack.c.l.b16 %v195
    %v662 = vunpack.c.l.b16 %v196
    %v663 = vunpack.c.h.b16 %v196
    %v664 = vunpack.c.l.b16 %v197
    %v665 = vunpack.c.h.b16 %v197
    %v666 = vunpack.c.l.b16 %v198
    %v667 = vunpack.c.l.b16 %v199
    %v668 = vunpack.c.h.b16 %v199
    %v669 = vunpack.c.l.b16 %v200
    %v670 = vunpack.c.h.b16 %v200
    %v671 = vunpack.c.l.b16 %v201
    %v672 = vunpack.c.l.b16 %v202
    %v673 = vunpack.c.h.b16 %v202
    %v674 = vunpack.c.l.b16 %v203
    %v675 = vunpack.c.h.b16 %v203
    %v676 = vunpack.c.l.b16 %v204
    %v677 = vunpack.c.l.b16 %v205
    %v678 = vunpack.c.h.b16 %v205
    %v679 = vunpack.c.l.b16 %v206
    %v680 = vunpack.c.h.b16 %v206
    %v681 = vunpack.c.l.b16 %v207
    %v682 = vunpack.c.l.b16 %v208
    %v683 = vunpack.c.h.b16 %v208
    %v684 = vunpack.c.l.b16 %v209
    %v685 = vunpack.c.h.b16 %v209
    %v686 = vunpack.c.l.b16 %v210
    %v687 = vunpack.c.l.b16 %v211
    %v688 = vunpack.c.h.b16 %v211
    %v689 = vunpack.c.l.b16 %v212
    %v690 = vunpack.c.h.b16 %v212
    %v691 = vunpack.c.l.b16 %v213
    %v692 = vunpack.c.l.b16 %v214
    %v693 = vunpack.c.h.b16 %v214
    %v694 = vunpack.c.l.b16 %v215
    %v695 = vunpack.c.h.b16 %v215
    %v696 = vunpack.c.l.b16 %v216
    %v697 = vunpack.c.l.b16 %v217
    %v698 = vunpack.c.h.b16 %v217
    %v699 = vunpack.c.l.b16 %v218
    %v700 = vunpack.c.h.b16 %v218
    %v701 = vunpack.c.l.b16 %v219
    %v702 = vunpack.c.l.b16 %v220
    %v703 = vunpack.c.h.b16 %v220
    %v704 = vunpack.c.l.b16 %v221
    %v705 = vunpack.c.h.b16 %v221
    %v706 = vunpack.c.l.b16 %v222
    %v707 = vunpack.c.l.b16 %v223
    %v708 = vunpack.c.h.b16 %v223
    %v709 = vunpack.c.l.b16 %v224
    %v710 = vunpack.c.h.b16 %v224
    %v711 = vunpack.c.l.b16 %v225
    %v712 = vunpack.c.l.b16 %v226
    %v713 = vunpack.c.h.b16 %v226
    %v714 = vunpack.c.l.b16 %v227
    %v715 = vunpack.c.h.b16 %v227
    %v716 = vunpack.c.l.b16 %v228
    %v717 = vunpack.c.l.b16 %v229
    %v718 = vunpack.c.h.b16 %v229
    %v719 = vunpack.c.l.b16 %v230
    %v720 = vunpack.c.h.b16 %v230
    %v721 = vunpack.c.l.b16 %v231
    %v722 = vunpack.c.l.b16 %v232
    %v723 = vunpack.c.h.b16 %v232
    %v724 = vunpack.c.l.b16 %v233
    %v725 = vunpack.c.h.b16 %v233
    %v726 = vunpack.c.l.b16 %v234
    %v727 = vunpack.c.l.b16 %v235
    %v728 = vunpack.c.h.b16 %v235
    %v729 = vunpack.c.l.b16 %v236
    %v730 = vunpack.c.h.b16 %v236
    %v731 = vunpack.c.l.b16 %v237
    %v732 = vunpack.c.l.b16 %v238
    %v733 = vunpack.c.h.b16 %v238
    %v734 = vunpack.c.l.b16 %v239
    %v735 = vunpack.c.h.b16 %v239
    %v736 = vunpack.c.l.b16 %v240
    %v737 = vunpack.c.l.b16 %v241
    %v738 = vunpack.c.h.b16 %v241
    %v739 = vunpack.c.l.b16 %v242
    %v740 = vunpack.c.h.b16 %v242
    %v741 = vunpack.c.l.b16 %v243
    %v742 = vunpack.c.l.b16 %v244
    %v743 = vunpack.c.h.b16 %v244
    %v744 = vunpack.c.l.b16 %v245
    %v745 = vunpack.c.h.b16 %v245
    %v746 = vunpack.c.l.b16 %v246
    %v747 = vunpack.c.l.b16 %v247
    %v748 = vunpack.c.h.b16 %v247
    %v749 = vunpack.c.l.b16 %v248
    %v750 = vunpack.c.h.b16 %v248
    %v751 = vunpack.c.l.b16 %v249
    %v752 = vunpack.c.l.b16 %v250
    %v753 = vunpack.c.h.b16 %v250
    %v754 = vunpack.c.l.b16 %v251
    %v755 = vunpack.c.h.b16 %v251
    %v756 = vunpack.c.l.b16 %v252
    %v757 = vunpack.c.l.b16 %v253
    %v758 = vunpack.c.h.b16 %v253
    %v759 = vunpack.c.l.b16 %v254
    %v760 = vunpack.c.h.b16 %v254
    %v761 = vunpack.c.l.b16 %v255
    %v762 = vunpack.c.l.b16 %v256
    %v763 = vunpack.c.h.b16 %v256
    %v764 = vunpack.c.l.b16 %v257
    %v765 = vunpack.c.h.b16 %v257
    %v766 = vunpack.c.l.b16 %v258
    %v767 = vunpack.c.l.b16 %v259
    %v768 = vunpack.c.h.b16 %v259
    %v769 = vunpack.c.l.b16 %v260
    %v770 = vunpack.c.h.b16 %v260
    %v771 = vunpack.c.l.b16 %v261
    %v772 = vunpack.c.l.b16 %v262
    %v773 = vunpack.c.h.b16 %v262
    %v774 = vunpack.c.l.b16 %v263
    %v775 = vunpack.c.h.b16 %v263
    %v776 = vunpack.c.l.b16 %v264
    %v777 = vunpack.c.l.b16 %v265
    %v778 = vunpack.c.h.b16 %v265
    %v779 = vunpack.c.l.b16 %v266
    %v780 = vunpack.c.h.b16 %v266
    %v781 = vunpack.c.l.b16 %v267
    %v782 = vunpack.c.l.b16 %v268
    %v783 = vunpack.c.h.b16 %v268
    %v784 = vunpack.c.l.b16 %v269
    %v785 = vunpack.c.h.b16 %v269
    %v786 = vunpack.c.l.b16 %v270
    %v787 = vunpack.c.l.b16 %v271
    %v788 = vunpack.c.h.b16 %v271
    %v789 = vunpack.c.l.b16 %v272
    %v790 = vunpack.c.h.b16 %v272
    %v791 = vunpack.c.l.b16 %v273
    %v792 = vunpack.c.l.b16 %v274
    %v793 = vunpack.c.h.b16 %v274
    %v794 = vunpack.c.l.b16 %v275
    %v795 = vunpack.c.h.b16 %v275
    %v796 = vunpack.c.l.b16 %v276
    %v797 = vunpack.c.l.b16 %v277
    %v798 = vunpack.c.h.b16 %v277
    %v799 = vunpack.c.l.b16 %v278
    %v800 = vunpack.c.h.b16 %v278
    %v801 = vunpack.c.l.b16 %v279
    %v802 = vunpack.c.l.b16 %v280
    %v803 = vunpack.c.h.b16 %v280
    %v804 = vunpack.c.l.b16 %v281
    %v805 = vunpack.c.h.b16 %v281
    %v806 = vunpack.c.l.b16 %v282
    %v807 = vunpack.c.l.b16 %v283
    %v808 = vunpack.c.h.b16 %v283
    %v809 = vunpack.c.l.b16 %v284
    %v810 = vunpack.c.h.b16 %v284
    %v811 = vunpack.c.l.b16 %v285
    %v812 = vunpack.c.l.b16 %v286
    %v813 = vunpack.c.h.b16 %v286
    %v814 = vunpack.c.l.b16 %v287
    %v815 = vunpack.c.h.b16 %v287
    %v816 = vunpack.c.l.b16 %v288
    %v817 = vunpack.c.l.b16 %v289
    %v818 = vunpack.c.h.b16 %v289
    %v819 = vunpack.c.l.b16 %v290
    %v820 = vunpack.c.h.b16 %v290
    %v821 = vunpack.c.l.b16 %v291
    %v822 = vpack.c.b16 %v507, %v502
    %v823 = vpack.c.b16 %v508, %v503
    %v824 = vpack.c.b16 %v509, %v504
    %v825 = vpack.c.b16 %v510, %v505
    %v826 = vpack.c.b16 %v511, %v506
    %v827 = vpack.c.b16 %v517, %v512
    %v828 = vpack.c.b16 %v518, %v513
    %v829 = vpack.c.b16 %v519, %v514
    %v830 = vpack.c.b16 %v520, %v515
    %v831 = vpack.c.b16 %v521, %v516
    %v832 = vpack.c.b16 %v527, %v522
    %v833 = vpack.c.b16 %v528, %v523
    %v834 = vpack.c.b16 %v529, %v524
    %v835 = vpack.c.b16 %v530, %v525
    %v836 = vpack.c.b16 %v531, %v526
    %v837 = vpack.c.b16 %v537, %v532
    %v838 = vpack.c.b16 %v538, %v533
    %v839 = vpack.c.b16 %v539, %v534
    %v840 = vpack.c.b16 %v540, %v535
    %v841 = vpack.c.b16 %v541, %v536
    %v842 = vpack.c.b16 %v547, %v542
    %v843 = vpack.c.b16 %v548, %v543
    %v844 = vpack.c.b16 %v549, %v544
    %v845 = vpack.c.b16 %v550, %v545
    %v846 = vpack.c.b16 %v551, %v546
    %v847 = vpack.c.b16 %v557, %v552
    %v848 = vpack.c.b16 %v558, %v553
    %v849 = vpack.c.b16 %v559, %v554
    %v850 = vpack.c.b16 %v560, %v555
    %v851 = vpack.c.b16 %v561, %v556
    %v852 = vpack.c.b16 %v567, %v562
    %v853 = vpack.c.b16 %v568, %v563
    %v854 = vpack.c.b16 %v569, %v564
    %v855 = vpack.c.b16 %v570, %v565
    %v856 = vpack.c.b16 %v571, %v566
    %v857 = vpack.c.b16 %v577, %v572
    %v858 = vpack.c.b16 %v578, %v573
    %v859 = vpack.c.b16 %v579, %v574
    %v860 = vpack.c.b16 %v580, %v575
    %v861 = vpack.c.b16 %v581, %v576
    %v862 = vpack.c.b16 %v587, %v582
    %v863 = vpack.c.b16 %v588, %v583
    %v864 = vpack.c.b16 %v589, %v584
    %v865 = vpack.c.b16 %v590, %v585
    %v866 = vpack.c.b16 %v591, %v586
    %v867 = vpack.c.b16 %v597, %v592
    %v868 = vpack.c.b16 %v598, %v593
    %v869 = vpack.c.b16 %v599, %v594
    %v870 = vpack.c.b16 %v600, %v595
    %v871 = vpack.c.b16 %v601, %v596
    %v872 = vpack.c.b16 %v607, %v602
    %v873 = vpack.c.b16 %v608, %v603
    %v874 = vpack.c.b16 %v609, %v604
    %v875 = vpack.c.b16 %v610, %v605
    %v876 = vpack.c.b16 %v611, %v606
    %v877 = vpack.c.b16 %v617, %v612
    %v878 = vpack.c.b16 %v618, %v613
    %v879 = vpack.c.b16 %v619, %v614
    %v880 = vpack.c.b16 %v620, %v615
    %v881 = vpack.c.b16 %v621, %v616
    %v882 = vpack.c.b16 %v627, %v622
    %v883 = vpack.c.b16 %v628, %v623
    %v884 = vpack.c.b16 %v629, %v624
    %v885 = vpack.c.b16 %v630, %v625
    %v886 = vpack.c.b16 %v631, %v626
    %v887 = vpack.c.b16 %v637, %v632
    %v888 = vpack.c.b16 %v638, %v633
    %v889 = vpack.c.b16 %v639, %v634
    %v890 = vpack.c.b16 %v640, %v635
    %v891 = vpack.c.b16 %v641, %v636
    %v892 = vpack.c.b16 %v647, %v642
    %v893 = vpack.c.b16 %v648, %v643
    %v894 = vpack.c.b16 %v649, %v644
    %v895 = vpack.c.b16 %v650, %v645
    %v896 = vpack.c.b16 %v651, %v646
    %v897 = vpack.c.b16 %v657, %v652
    %v898 = vpack.c.b16 %v658, %v653
    %v899 = vpack.c.b16 %v659, %v654
    %v900 = vpack.c.b16 %v660, %v655
    %v901 = vpack.c.b16 %v661, %v656
    %v902 = vpack.c.b16 %v667, %v662
    %v903 = vpack.c.b16 %v668, %v663
    %v904 = vpack.c.b16 %v669, %v664
    %v905 = vpack.c.b16 %v670, %v665
    %v906 = vpack.c.b16 %v671, %v666
    %v907 = vpack.c.b16 %v677, %v672
    %v908 = vpack.c.b16 %v678, %v673
    %v909 = vpack.c.b16 %v679, %v674
    %v910 = vpack.c.b16 %v680, %v675
    %v911 = vpack.c.b16 %v681, %v676
    %v912 = vpack.c.b16 %v687, %v682
    %v913 = vpack.c.b16 %v688, %v683
    %v914 = vpack.c.b16 %v689, %v684
    %v915 = vpack.c.b16 %v690, %v685
    %v916 = vpack.c.b16 %v691, %v686
    %v917 = vpack.c.b16 %v697, %v692
    %v918 = vpack.c.b16 %v698, %v693
    %v919 = vpack.c.b16 %v699, %v694
    %v920 = vpack.c.b16 %v700, %v695
    %v921 = vpack.c.b16 %v701, %v696
    %v922 = vpack.c.b16 %v707, %v702
    %v923 = vpack.c.b16 %v708, %v703
    %v924 = vpack.c.b16 %v709, %v704
    %v925 = vpack.c.b16 %v710, %v705
    %v926 = vpack.c.b16 %v711, %v706
    %v927 = vpack.c.b16 %v717, %v712
    %v928 = vpack.c.b16 %v718, %v713
    %v929 = vpack.c.b16 %v719, %v714
    %v930 = vpack.c.b16 %v720, %v715
    %v931 = vpack.c.b16 %v721, %v716
    %v932 = vpack.c.b16 %v727, %v722
    %v933 = vpack.c.b16 %v728, %v723
    %v934 = vpack.c.b16 %v729, %v724
    %v935 = vpack.c.b16 %v730, %v725
    %v936 = vpack.c.b16 %v731, %v726
    %v937 = vpack.c.b16 %v737, %v732
    %v938 = vpack.c.b16 %v738, %v733
    %v939 = vpack.c.b16 %v739, %v734
    %v940 = vpack.c.b16 %v740, %v735
    %v941 = vpack.c.b16 %v741, %v736
    %v942 = vpack.c.b16 %v747, %v742
    %v943 = vpack.c.b16 %v748, %v743
    %v944 = vpack.c.b16 %v749, %v744
    %v945 = vpack.c.b16 %v750, %v745
    %v946 = vpack.c.b16 %v751, %v746
    %v947 = vpack.c.b16 %v757, %v752
    %v948 = vpack.c.b16 %v758, %v753
    %v949 = vpack.c.b16 %v759, %v754
    %v950 = vpack.c.b16 %v760, %v755
    %v951 = vpack.c.b16 %v761, %v756
    %v952 = vpack.c.b16 %v767, %v762
    %v953 = vpack.c.b16 %v768, %v763
    %v954 = vpack.c.b16 %v769, %v764
    %v955 = vpack.c.b16 %v770, %v765
    %v956 = vpack.c.b16 %v771, %v766
    %v957 = vpack.c.b16 %v777, %v772
    %v958 = vpack.c.b16 %v778, %v773
    %v959 = vpack.c.b16 %v779, %v774
    %v960 = vpack.c.b16 %v780, %v775
    %v961 = vpack.c.b16 %v781, %v776
    %v962 = vpack.c.b16 %v787, %v782
    %v963 = vpack.c.b16 %v788, %v783
    %v964 = vpack.c.b16 %v789, %v784
    %v965 = vpack.c.b16 %v790, %v785
    %v966 = vpack.c.b16 %v791, %v786
    %v967 = vpack.c.b16 %v797, %v792
    %v968 = vpack.c.b16 %v798, %v793
    %v969 = vpack.c.b16 %v799, %v794
    %v970 = vpack.c.b16 %v800, %v795
    %v971 = vpack.c.b16 %v801, %v796
    %v972 = vpack.c.b16 %v807, %v802
    %v973 = vpack.c.b16 %v808, %v803
    %v974 = vpack.c.b16 %v809, %v804
    %v975 = vpack.c.b16 %v810, %v805
    %v976 = vpack.c.b16 %v811, %v806
    %v977 = vpack.c.b16 %v817, %v812
    %v978 = vpack.c.b16 %v818, %v813
    %v979 = vpack.c.b16 %v819, %v814
    %v980 = vpack.c.b16 %v820, %v815
    %v981 = vpack.c.b16 %v821, %v816
    %1142 = vmatpush.bf16.msra.mxu0 %v857
    %1143 = vmatpush.bf16.msra.mxu0 %v852
    %1144 = vmatpush.bf16.msra.mxu0 %v847
    %1145 = vmatpush.bf16.msra.mxu0 %v842
    %1146 = vmatpush.bf16.msra.mxu0 %v837
    %1147 = vmatpush.bf16.msra.mxu0 %v832
    %1148 = vmatpush.bf16.msra.mxu0 %v827
    %1149 = vmatpush.bf16.msra.mxu0 %v822
    %1150 = vmatmul.bf16.gmra.mxu0 %v295
    %v1151 = vpop.f32.mrf.mxu0
    %v1152 = vadd.f32 %v300, %v1151
    %v1153 = vpop.f32.mrf.mxu0
    %v1154 = vadd.f32 %v300, %v1153
    %1155 = vdwg.mxu0
    %1156 = vmatpush.bf16.msra.mxu0 %v897
    %1157 = vmatpush.bf16.msra.mxu0 %v892
    %1158 = vmatpush.bf16.msra.mxu0 %v887
    %1159 = vmatpush.bf16.msra.mxu0 %v882
    %1160 = vmatpush.bf16.msra.mxu0 %v877
    %1161 = vmatpush.bf16.msra.mxu0 %v872
    %1162 = vmatpush.bf16.msra.mxu0 %v867
    %1163 = vmatpush.bf16.msra.mxu0 %v862
    %1164 = vmatmul.bf16.gmra.mxu0 %v296
    %v1165 = vpop.f32.mrf.mxu0
    %v1166 = vadd.f32 %v1152, %v1165
    %v1167 = vpop.f32.mrf.mxu0
    %v1168 = vadd.f32 %v1154, %v1167
    %1169 = vdwg.mxu0
    %1170 = vmatpush.bf16.msra.mxu0 %v937
    %1171 = vmatpush.bf16.msra.mxu0 %v932
    %1172 = vmatpush.bf16.msra.mxu0 %v927
    %1173 = vmatpush.bf16.msra.mxu0 %v922
    %1174 = vmatpush.bf16.msra.mxu0 %v917
    %1175 = vmatpush.bf16.msra.mxu0 %v912
    %1176 = vmatpush.bf16.msra.mxu0 %v907
    %1177 = vmatpush.bf16.msra.mxu0 %v902
    %1178 = vmatmul.bf16.gmra.mxu0 %v297
    %v1179 = vpop.f32.mrf.mxu0
    %v1180 = vadd.f32 %v1166, %v1179
    %v1181 = vpop.f32.mrf.mxu0
    %v1182 = vadd.f32 %v1168, %v1181
    %1183 = vdwg.mxu0
    %1184 = vmatpush.bf16.msra.mxu0 %v977
    %1185 = vmatpush.bf16.msra.mxu0 %v972
    %1186 = vmatpush.bf16.msra.mxu0 %v967
    %1187 = vmatpush.bf16.msra.mxu0 %v962
    %1188 = vmatpush.bf16.msra.mxu0 %v957
    %1189 = vmatpush.bf16.msra.mxu0 %v952
    %1190 = vmatpush.bf16.msra.mxu0 %v947
    %1191 = vmatpush.bf16.msra.mxu0 %v942
    %1192 = vmatmul.bf16.gmra.mxu0 %v298
    %v1193 = vpop.f32.mrf.mxu0
    %v1194 = vadd.f32 %v1180, %v1193
    %v1195 = vpop.f32.mrf.mxu0
    %v1196 = vadd.f32 %v1182, %v1195
    %1197 = vdwg.mxu0
    %1198 = vmatpush.bf16.msra.mxu0 %v858
    %1199 = vmatpush.bf16.msra.mxu0 %v853
    %1200 = vmatpush.bf16.msra.mxu0 %v848
    %1201 = vmatpush.bf16.msra.mxu0 %v843
    %1202 = vmatpush.bf16.msra.mxu0 %v838
    %1203 = vmatpush.bf16.msra.mxu0 %v833
    %1204 = vmatpush.bf16.msra.mxu0 %v828
    %1205 = vmatpush.bf16.msra.mxu0 %v823
    %1206 = vmatmul.bf16.gmra.mxu0 %v295
    %v1207 = vpop.f32.mrf.mxu0
    %v1208 = vadd.f32 %v301, %v1207
    %v1209 = vpop.f32.mrf.mxu0
    %v1210 = vadd.f32 %v301, %v1209
    %1211 = vdwg.mxu0
    %1212 = vmatpush.bf16.msra.mxu0 %v898
    %1213 = vmatpush.bf16.msra.mxu0 %v893
    %1214 = vmatpush.bf16.msra.mxu0 %v888
    %1215 = vmatpush.bf16.msra.mxu0 %v883
    %1216 = vmatpush.bf16.msra.mxu0 %v878
    %1217 = vmatpush.bf16.msra.mxu0 %v873
    %1218 = vmatpush.bf16.msra.mxu0 %v868
    %1219 = vmatpush.bf16.msra.mxu0 %v863
    %1220 = vmatmul.bf16.gmra.mxu0 %v296
    %v1221 = vpop.f32.mrf.mxu0
    %v1222 = vadd.f32 %v1208, %v1221
    %v1223 = vpop.f32.mrf.mxu0
    %v1224 = vadd.f32 %v1210, %v1223
    %1225 = vdwg.mxu0
    %1226 = vmatpush.bf16.msra.mxu0 %v938
    %1227 = vmatpush.bf16.msra.mxu0 %v933
    %1228 = vmatpush.bf16.msra.mxu0 %v928
    %1229 = vmatpush.bf16.msra.mxu0 %v923
    %1230 = vmatpush.bf16.msra.mxu0 %v918
    %1231 = vmatpush.bf16.msra.mxu0 %v913
    %1232 = vmatpush.bf16.msra.mxu0 %v908
    %1233 = vmatpush.bf16.msra.mxu0 %v903
    %1234 = vmatmul.bf16.gmra.mxu0 %v297
    %v1235 = vpop.f32.mrf.mxu0
    %v1236 = vadd.f32 %v1222, %v1235
    %v1237 = vpop.f32.mrf.mxu0
    %v1238 = vadd.f32 %v1224, %v1237
    %1239 = vdwg.mxu0
    %1240 = vmatpush.bf16.msra.mxu0 %v978
    %1241 = vmatpush.bf16.msra.mxu0 %v973
    %1242 = vmatpush.bf16.msra.mxu0 %v968
    %1243 = vmatpush.bf16.msra.mxu0 %v963
    %1244 = vmatpush.bf16.msra.mxu0 %v958
    %1245 = vmatpush.bf16.msra.mxu0 %v953
    %1246 = vmatpush.bf16.msra.mxu0 %v948
    %1247 = vmatpush.bf16.msra.mxu0 %v943
    %1248 = vmatmul.bf16.gmra.mxu0 %v298
    %v1249 = vpop.f32.mrf.mxu0
    %v1250 = vadd.f32 %v1236, %v1249
    %v1251 = vpop.f32.mrf.mxu0
    %v1252 = vadd.f32 %v1238, %v1251
    %1253 = vdwg.mxu0
    %1254 = vmatpush.bf16.msra.mxu0 %v859
    %1255 = vmatpush.bf16.msra.mxu0 %v854
    %1256 = vmatpush.bf16.msra.mxu0 %v849
    %1257 = vmatpush.bf16.msra.mxu0 %v844
    %1258 = vmatpush.bf16.msra.mxu0 %v839
    %1259 = vmatpush.bf16.msra.mxu0 %v834
    %1260 = vmatpush.bf16.msra.mxu0 %v829
    %1261 = vmatpush.bf16.msra.mxu0 %v824
    %1262 = vmatmul.bf16.gmra.mxu0 %v295
    %v1263 = vpop.f32.mrf.mxu0
    %v1264 = vadd.f32 %v302, %v1263
    %v1265 = vpop.f32.mrf.mxu0
    %v1266 = vadd.f32 %v302, %v1265
    %1267 = vdwg.mxu0
    %1268 = vmatpush.bf16.msra.mxu0 %v899
    %1269 = vmatpush.bf16.msra.mxu0 %v894
    %1270 = vmatpush.bf16.msra.mxu0 %v889
    %1271 = vmatpush.bf16.msra.mxu0 %v884
    %1272 = vmatpush.bf16.msra.mxu0 %v879
    %1273 = vmatpush.bf16.msra.mxu0 %v874
    %1274 = vmatpush.bf16.msra.mxu0 %v869
    %1275 = vmatpush.bf16.msra.mxu0 %v864
    %1276 = vmatmul.bf16.gmra.mxu0 %v296
    %v1277 = vpop.f32.mrf.mxu0
    %v1278 = vadd.f32 %v1264, %v1277
    %v1279 = vpop.f32.mrf.mxu0
    %v1280 = vadd.f32 %v1266, %v1279
    %1281 = vdwg.mxu0
    %1282 = vmatpush.bf16.msra.mxu0 %v939
    %1283 = vmatpush.bf16.msra.mxu0 %v934
    %1284 = vmatpush.bf16.msra.mxu0 %v929
    %1285 = vmatpush.bf16.msra.mxu0 %v924
    %1286 = vmatpush.bf16.msra.mxu0 %v919
    %1287 = vmatpush.bf16.msra.mxu0 %v914
    %1288 = vmatpush.bf16.msra.mxu0 %v909
    %1289 = vmatpush.bf16.msra.mxu0 %v904
    %1290 = vmatmul.bf16.gmra.mxu0 %v297
    %v1291 = vpop.f32.mrf.mxu0
    %v1292 = vadd.f32 %v1278, %v1291
    %v1293 = vpop.f32.mrf.mxu0
    %v1294 = vadd.f32 %v1280, %v1293
    %1295 = vdwg.mxu0
    %1296 = vmatpush.bf16.msra.mxu0 %v979
    %1297 = vmatpush.bf16.msra.mxu0 %v974
    %1298 = vmatpush.bf16.msra.mxu0 %v969
    %1299 = vmatpush.bf16.msra.mxu0 %v964
    %1300 = vmatpush.bf16.msra.mxu0 %v959
    %1301 = vmatpush.bf16.msra.mxu0 %v954
    %1302 = vmatpush.bf16.msra.mxu0 %v949
    %1303 = vmatpush.bf16.msra.mxu0 %v944
    %1304 = vmatmul.bf16.gmra.mxu0 %v298
    %v1305 = vpop.f32.mrf.mxu0
    %v1306 = vadd.f32 %v1292, %v1305
    %v1307 = vpop.f32.mrf.mxu0
    %v1308 = vadd.f32 %v1294, %v1307
    %1309 = vdwg.mxu0
    %1310 = vmatpush.bf16.msra.mxu0 %v860
    %1311 = vmatpush.bf16.msra.mxu0 %v855
    %1312 = vmatpush.bf16.msra.mxu0 %v850
    %1313 = vmatpush.bf16.msra.mxu0 %v845
    %1314 = vmatpush.bf16.msra.mxu0 %v840
    %1315 = vmatpush.bf16.msra.mxu0 %v835
    %1316 = vmatpush.bf16.msra.mxu0 %v830
    %1317 = vmatpush.bf16.msra.mxu0 %v825
    %1318 = vmatmul.bf16.gmra.mxu0 %v295
    %v1319 = vpop.f32.mrf.mxu0
    %v1320 = vadd.f32 %v303, %v1319
    %v1321 = vpop.f32.mrf.mxu0
    %v1322 = vadd.f32 %v303, %v1321
    %1323 = vdwg.mxu0
    %1324 = vmatpush.bf16.msra.mxu0 %v900
    %1325 = vmatpush.bf16.msra.mxu0 %v895
    %1326 = vmatpush.bf16.msra.mxu0 %v890
    %1327 = vmatpush.bf16.msra.mxu0 %v885
    %1328 = vmatpush.bf16.msra.mxu0 %v880
    %1329 = vmatpush.bf16.msra.mxu0 %v875
    %1330 = vmatpush.bf16.msra.mxu0 %v870
    %1331 = vmatpush.bf16.msra.mxu0 %v865
    %1332 = vmatmul.bf16.gmra.mxu0 %v296
    %v1333 = vpop.f32.mrf.mxu0
    %v1334 = vadd.f32 %v1320, %v1333
    %v1335 = vpop.f32.mrf.mxu0
    %v1336 = vadd.f32 %v1322, %v1335
    %1337 = vdwg.mxu0
    %1338 = vmatpush.bf16.msra.mxu0 %v940
    %1339 = vmatpush.bf16.msra.mxu0 %v935
    %1340 = vmatpush.bf16.msra.mxu0 %v930
    %1341 = vmatpush.bf16.msra.mxu0 %v925
    %1342 = vmatpush.bf16.msra.mxu0 %v920
    %1343 = vmatpush.bf16.msra.mxu0 %v915
    %1344 = vmatpush.bf16.msra.mxu0 %v910
    %1345 = vmatpush.bf16.msra.mxu0 %v905
    %1346 = vmatmul.bf16.gmra.mxu0 %v297
    %v1347 = vpop.f32.mrf.mxu0
    %v1348 = vadd.f32 %v1334, %v1347
    %v1349 = vpop.f32.mrf.mxu0
    %v1350 = vadd.f32 %v1336, %v1349
    %1351 = vdwg.mxu0
    %1352 = vmatpush.bf16.msra.mxu0 %v980
    %1353 = vmatpush.bf16.msra.mxu0 %v975
    %1354 = vmatpush.bf16.msra.mxu0 %v970
    %1355 = vmatpush.bf16.msra.mxu0 %v965
    %1356 = vmatpush.bf16.msra.mxu0 %v960
    %1357 = vmatpush.bf16.msra.mxu0 %v955
    %1358 = vmatpush.bf16.msra.mxu0 %v950
    %1359 = vmatpush.bf16.msra.mxu0 %v945
    %1360 = vmatmul.bf16.gmra.mxu0 %v298
    %v1361 = vpop.f32.mrf.mxu0
    %v1362 = vadd.f32 %v1348, %v1361
    %v1363 = vpop.f32.mrf.mxu0
    %v1364 = vadd.f32 %v1350, %v1363
    %1365 = vdwg.mxu0
    %1366 = vmatpush.bf16.msra.mxu0 %v861
    %1367 = vmatpush.bf16.msra.mxu0 %v856
    %1368 = vmatpush.bf16.msra.mxu0 %v851
    %1369 = vmatpush.bf16.msra.mxu0 %v846
    %1370 = vmatpush.bf16.msra.mxu0 %v841
    %1371 = vmatpush.bf16.msra.mxu0 %v836
    %1372 = vmatpush.bf16.msra.mxu0 %v831
    %1373 = vmatpush.bf16.msra.mxu0 %v826
    %1374 = vmatmul.bf16.gmra.mxu0 %v295
    %v1375 = vpop.f32.mrf.mxu0
    %v1376 = vadd.f32 %v304, %v1375
    %v1377 = vpop.f32.mrf.mxu0
    %v1378 = vadd.f32 %v304, %v1377
    %1379 = vdwg.mxu0
    %1380 = vmatpush.bf16.msra.mxu0 %v901
    %1381 = vmatpush.bf16.msra.mxu0 %v896
    %1382 = vmatpush.bf16.msra.mxu0 %v891
    %1383 = vmatpush.bf16.msra.mxu0 %v886
    %1384 = vmatpush.bf16.msra.mxu0 %v881
    %1385 = vmatpush.bf16.msra.mxu0 %v876
    %1386 = vmatpush.bf16.msra.mxu0 %v871
    %1387 = vmatpush.bf16.msra.mxu0 %v866
    %1388 = vmatmul.bf16.gmra.mxu0 %v296
    %v1389 = vpop.f32.mrf.mxu0
    %v1390 = vadd.f32 %v1376, %v1389
    %v1391 = vpop.f32.mrf.mxu0
    %v1392 = vadd.f32 %v1378, %v1391
    %1393 = vdwg.mxu0
    %1394 = vmatpush.bf16.msra.mxu0 %v941
    %1395 = vmatpush.bf16.msra.mxu0 %v936
    %1396 = vmatpush.bf16.msra.mxu0 %v931
    %1397 = vmatpush.bf16.msra.mxu0 %v926
    %1398 = vmatpush.bf16.msra.mxu0 %v921
    %1399 = vmatpush.bf16.msra.mxu0 %v916
    %1400 = vmatpush.bf16.msra.mxu0 %v911
    %1401 = vmatpush.bf16.msra.mxu0 %v906
    %1402 = vmatmul.bf16.gmra.mxu0 %v297
    %v1403 = vpop.f32.mrf.mxu0
    %v1404 = vadd.f32 %v1390, %v1403
    %v1405 = vpop.f32.mrf.mxu0
    %v1406 = vadd.f32 %v1392, %v1405
    %1407 = vdwg.mxu0
    %1408 = vmatpush.bf16.msra.mxu0 %v981
    %1409 = vmatpush.bf16.msra.mxu0 %v976
    %1410 = vmatpush.bf16.msra.mxu0 %v971
    %1411 = vmatpush.bf16.msra.mxu0 %v966
    %1412 = vmatpush.bf16.msra.mxu0 %v961
    %1413 = vmatpush.bf16.msra.mxu0 %v956
    %1414 = vmatpush.bf16.msra.mxu0 %v951
    %1415 = vmatpush.bf16.msra.mxu0 %v946
    %1416 = vmatmul.bf16.gmra.mxu0 %v298
    %v1417 = vpop.f32.mrf.mxu0
    %v1418 = vadd.f32 %v1404, %v1417
    %v1419 = vpop.f32.mrf.mxu0
    %v1420 = vadd.f32 %v1406, %v1419
    %1421 = vdwg.mxu0
    %v1422 = vmax.f32 %v1194, 0.0
    %v1423 = vmax.f32 %v1250, 0.0
    %v1424 = vmax.f32 %v1306, 0.0
    %v1425 = vmax.f32 %v1362, 0.0
    %v1426 = vmax.f32 %v1418, 0.0
    %v1427 = vmax.f32 %v1196, 0.0
    %v1428 = vmax.f32 %v1252, 0.0
    %v1429 = vmax.f32 %v1308, 0.0
    %v1430 = vmax.f32 %v1364, 0.0
    %v1431 = vmax.f32 %v1420, 0.0
    %v1432 = vld [vmem:[#allocation5] sm:$0xff]
    %v1433 = vld [vmem:[#allocation5 + $0x8] sm:$0xff]
    %v1434 = vld [vmem:[#allocation5 + $0x10] sm:$0xff]
    %v1435 = vld [vmem:[#allocation5 + $0x18] sm:$0xff]
    %v1436 = vld [vmem:[#allocation5 + $0x20] sm:$0xff]
    %v1437 = vld [vmem:[#allocation5 + $0x28] sm:$0xff]
    %v1438 = vld [vmem:[#allocation5 + $0x30] sm:$0xff]
    %v1439 = vld [vmem:[#allocation5 + $0x38] sm:$0xff]
    %v1440 = vld [vmem:[#allocation5 + $0x40] sm:$0xff]
    %v1441 = vld [vmem:[#allocation5 + $0x48] sm:$0xff]
    %v1442 = vld [vmem:[#allocation5 + $0x50] sm:$0xff]
    %v1443 = vld [vmem:[#allocation5 + $0x58] sm:$0xff]
    %v1444 = vld [vmem:[#allocation5 + $0x60] sm:$0xff]
    %v1445 = vld [vmem:[#allocation5 + $0x68] sm:$0xff]
    %v1446 = vld [vmem:[#allocation5 + $0x70] sm:$0xff]
    %v1447 = vld [vmem:[#allocation5 + $0x78] sm:$0xff]
    %v1448 = vld [vmem:[#allocation5 + $0x80] sm:$0xff]
    %v1449 = vld [vmem:[#allocation5 + $0x88] sm:$0xff]
    %v1450 = vld [vmem:[#allocation5 + $0x90] sm:$0xff]
    %v1451 = vld [vmem:[#allocation5 + $0x98] sm:$0xff]
    %v1452 = vld [vmem:[#allocation5 + $0xa0] sm:$0xff]
    %v1453 = vld [vmem:[#allocation5 + $0xa8] sm:$0xff]
    %v1454 = vld [vmem:[#allocation5 + $0xb0] sm:$0xff]
    %v1455 = vld [vmem:[#allocation5 + $0xb8] sm:$0xff]
    %v1456 = vld [vmem:[#allocation5 + $0xc0] sm:$0xff]
    %v1457 = vld [vmem:[#allocation5 + $0xc8] sm:$0xff]
    %v1458 = vld [vmem:[#allocation5 + $0xd0] sm:$0xff]
    %v1459 = vld [vmem:[#allocation5 + $0xd8] sm:$0xff]
    %v1460 = vld [vmem:[#allocation5 + $0xe0] sm:$0xff]
    %v1461 = vld [vmem:[#allocation5 + $0xe8] sm:$0xff]
    %v1462 = vld [vmem:[#allocation5 + $0xf0] sm:$0xff]
    %v1463 = vld [vmem:[#allocation5 + $0xf8] sm:$0xff]
    %v1464 = vld [vmem:[#allocation5 + $0x100] sm:$0xff]
    %v1465 = vld [vmem:[#allocation5 + $0x108] sm:$0xff]
    %v1466 = vld [vmem:[#allocation5 + $0x110] sm:$0xff]
    %v1467 = vld [vmem:[#allocation5 + $0x118] sm:$0xff]
    %v1468 = vld [vmem:[#allocation5 + $0x120] sm:$0xff]
    %v1469 = vld [vmem:[#allocation5 + $0x128] sm:$0xff]
    %v1470 = vld [vmem:[#allocation5 + $0x130] sm:$0xff]
    %v1471 = vld [vmem:[#allocation5 + $0x138] sm:$0xff]
    %v1472 = vld [vmem:[#allocation5 + $0x140] sm:$0xff]
    %v1473 = vld [vmem:[#allocation5 + $0x148] sm:$0xff]
    %v1474 = vld [vmem:[#allocation5 + $0x150] sm:$0xff]
    %v1475 = vld [vmem:[#allocation5 + $0x158] sm:$0xff]
    %v1476 = vld [vmem:[#allocation5 + $0x160] sm:$0xff]
    %v1477 = vld [vmem:[#allocation5 + $0x168] sm:$0xff]
    %v1478 = vld [vmem:[#allocation5 + $0x170] sm:$0xff]
    %v1479 = vld [vmem:[#allocation5 + $0x178] sm:$0xff]
    %v1480 = vld [vmem:[#allocation5 + $0x180] sm:$0xff]
    %v1481 = vld [vmem:[#allocation5 + $0x188] sm:$0xff]
    %v1482 = vld [vmem:[#allocation5 + $0x190] sm:$0xff]
    %v1483 = vld [vmem:[#allocation5 + $0x198] sm:$0xff]
    %v1484 = vld [vmem:[#allocation5 + $0x1a0] sm:$0xff]
    %v1485 = vld [vmem:[#allocation5 + $0x1a8] sm:$0xff]
    %v1486 = vld [vmem:[#allocation5 + $0x1b0] sm:$0xff]
    %v1487 = vld [vmem:[#allocation5 + $0x1b8] sm:$0xff]
    %v1488 = vld [vmem:[#allocation5 + $0x1c0] sm:$0xff]
    %v1489 = vld [vmem:[#allocation5 + $0x1c8] sm:$0xff]
    %v1490 = vld [vmem:[#allocation5 + $0x1d0] sm:$0xff]
    %v1491 = vld [vmem:[#allocation5 + $0x1d8] sm:$0xff]
    %v1492 = vld [vmem:[#allocation5 + $0x1e0] sm:$0xff]
    %v1493 = vld [vmem:[#allocation5 + $0x1e8] sm:$0xff]
    %v1494 = vld [vmem:[#allocation5 + $0x1f0] sm:$0xff]
    %v1495 = vld [vmem:[#allocation5 + $0x1f8] sm:$0xff]
    %v1496 = vld [vmem:[#allocation5 + $0x200] sm:$0xff]
    %v1497 = vld [vmem:[#allocation5 + $0x208] sm:$0xff]
    %v1498 = vld [vmem:[#allocation5 + $0x210] sm:$0xff]
    %v1499 = vld [vmem:[#allocation5 + $0x218] sm:$0xff]
    %v1500 = vld [vmem:[#allocation5 + $0x220] sm:$0xff]
    %v1501 = vld [vmem:[#allocation5 + $0x228] sm:$0xff]
    %v1502 = vld [vmem:[#allocation5 + $0x230] sm:$0xff]
    %v1503 = vld [vmem:[#allocation5 + $0x238] sm:$0xff]
    %v1504 = vld [vmem:[#allocation5 + $0x240] sm:$0xff]
    %v1505 = vld [vmem:[#allocation5 + $0x248] sm:$0xff]
    %v1506 = vld [vmem:[#allocation5 + $0x250] sm:$0xff]
    %v1507 = vld [vmem:[#allocation5 + $0x258] sm:$0xff]
    %v1508 = vld [vmem:[#allocation5 + $0x260] sm:$0xff]
    %v1509 = vld [vmem:[#allocation5 + $0x268] sm:$0xff]
    %v1510 = vld [vmem:[#allocation5 + $0x270] sm:$0xff]
    %v1511 = vld [vmem:[#allocation5 + $0x278] sm:$0xff]
    %s1512 = scalar_lea.vmem %s4, 1
    %v1513 = vld [vmem:[%s1512] ss:$8 sm:$0x3]
    %v1514 = vpack.c.bf16 %v1427, %v1422
    %v1515 = vpack.c.bf16 %v1428, %v1423
    %v1516 = vpack.c.bf16 %v1429, %v1424
    %v1517 = vpack.c.bf16 %v1430, %v1425
    %v1518 = vpack.c.bf16 %v1431, %v1426
    %v1520 = vperm.slane %v1513, 0
    %v1521 = vperm.slane %v1513, 1
    %v1604 = vunpack.c.l.b16 %v1432
    %v1605 = vunpack.c.h.b16 %v1432
    %v1606 = vunpack.c.l.b16 %v1433
    %v1607 = vunpack.c.h.b16 %v1433
    %v1608 = vunpack.c.l.b16 %v1434
    %v1609 = vunpack.c.h.b16 %v1434
    %v1610 = vunpack.c.l.b16 %v1435
    %v1611 = vunpack.c.h.b16 %v1435
    %v1612 = vunpack.c.l.b16 %v1436
    %v1613 = vunpack.c.h.b16 %v1436
    %v1614 = vunpack.c.l.b16 %v1437
    %v1615 = vunpack.c.h.b16 %v1437
    %v1616 = vunpack.c.l.b16 %v1438
    %v1617 = vunpack.c.h.b16 %v1438
    %v1618 = vunpack.c.l.b16 %v1439
    %v1619 = vunpack.c.h.b16 %v1439
    %v1620 = vunpack.c.l.b16 %v1440
    %v1621 = vunpack.c.h.b16 %v1440
    %v1622 = vunpack.c.l.b16 %v1441
    %v1623 = vunpack.c.h.b16 %v1441
    %v1624 = vunpack.c.l.b16 %v1442
    %v1625 = vunpack.c.h.b16 %v1442
    %v1626 = vunpack.c.l.b16 %v1443
    %v1627 = vunpack.c.h.b16 %v1443
    %v1628 = vunpack.c.l.b16 %v1444
    %v1629 = vunpack.c.h.b16 %v1444
    %v1630 = vunpack.c.l.b16 %v1445
    %v1631 = vunpack.c.h.b16 %v1445
    %v1632 = vunpack.c.l.b16 %v1446
    %v1633 = vunpack.c.h.b16 %v1446
    %v1634 = vunpack.c.l.b16 %v1447
    %v1635 = vunpack.c.h.b16 %v1447
    %v1636 = vunpack.c.l.b16 %v1448
    %v1637 = vunpack.c.h.b16 %v1448
    %v1638 = vunpack.c.l.b16 %v1449
    %v1639 = vunpack.c.h.b16 %v1449
    %v1640 = vunpack.c.l.b16 %v1450
    %v1641 = vunpack.c.h.b16 %v1450
    %v1642 = vunpack.c.l.b16 %v1451
    %v1643 = vunpack.c.h.b16 %v1451
    %v1644 = vunpack.c.l.b16 %v1452
    %v1645 = vunpack.c.h.b16 %v1452
    %v1646 = vunpack.c.l.b16 %v1453
    %v1647 = vunpack.c.h.b16 %v1453
    %v1648 = vunpack.c.l.b16 %v1454
    %v1649 = vunpack.c.h.b16 %v1454
    %v1650 = vunpack.c.l.b16 %v1455
    %v1651 = vunpack.c.h.b16 %v1455
    %v1652 = vunpack.c.l.b16 %v1456
    %v1653 = vunpack.c.h.b16 %v1456
    %v1654 = vunpack.c.l.b16 %v1457
    %v1655 = vunpack.c.h.b16 %v1457
    %v1656 = vunpack.c.l.b16 %v1458
    %v1657 = vunpack.c.h.b16 %v1458
    %v1658 = vunpack.c.l.b16 %v1459
    %v1659 = vunpack.c.h.b16 %v1459
    %v1660 = vunpack.c.l.b16 %v1460
    %v1661 = vunpack.c.h.b16 %v1460
    %v1662 = vunpack.c.l.b16 %v1461
    %v1663 = vunpack.c.h.b16 %v1461
    %v1664 = vunpack.c.l.b16 %v1462
    %v1665 = vunpack.c.h.b16 %v1462
    %v1666 = vunpack.c.l.b16 %v1463
    %v1667 = vunpack.c.h.b16 %v1463
    %v1668 = vunpack.c.l.b16 %v1464
    %v1669 = vunpack.c.h.b16 %v1464
    %v1670 = vunpack.c.l.b16 %v1465
    %v1671 = vunpack.c.h.b16 %v1465
    %v1672 = vunpack.c.l.b16 %v1466
    %v1673 = vunpack.c.h.b16 %v1466
    %v1674 = vunpack.c.l.b16 %v1467
    %v1675 = vunpack.c.h.b16 %v1467
    %v1676 = vunpack.c.l.b16 %v1468
    %v1677 = vunpack.c.h.b16 %v1468
    %v1678 = vunpack.c.l.b16 %v1469
    %v1679 = vunpack.c.h.b16 %v1469
    %v1680 = vunpack.c.l.b16 %v1470
    %v1681 = vunpack.c.h.b16 %v1470
    %v1682 = vunpack.c.l.b16 %v1471
    %v1683 = vunpack.c.h.b16 %v1471
    %v1684 = vunpack.c.l.b16 %v1472
    %v1685 = vunpack.c.h.b16 %v1472
    %v1686 = vunpack.c.l.b16 %v1473
    %v1687 = vunpack.c.h.b16 %v1473
    %v1688 = vunpack.c.l.b16 %v1474
    %v1689 = vunpack.c.h.b16 %v1474
    %v1690 = vunpack.c.l.b16 %v1475
    %v1691 = vunpack.c.h.b16 %v1475
    %v1692 = vunpack.c.l.b16 %v1476
    %v1693 = vunpack.c.h.b16 %v1476
    %v1694 = vunpack.c.l.b16 %v1477
    %v1695 = vunpack.c.h.b16 %v1477
    %v1696 = vunpack.c.l.b16 %v1478
    %v1697 = vunpack.c.h.b16 %v1478
    %v1698 = vunpack.c.l.b16 %v1479
    %v1699 = vunpack.c.h.b16 %v1479
    %v1700 = vunpack.c.l.b16 %v1480
    %v1701 = vunpack.c.h.b16 %v1480
    %v1702 = vunpack.c.l.b16 %v1481
    %v1703 = vunpack.c.h.b16 %v1481
    %v1704 = vunpack.c.l.b16 %v1482
    %v1705 = vunpack.c.h.b16 %v1482
    %v1706 = vunpack.c.l.b16 %v1483
    %v1707 = vunpack.c.h.b16 %v1483
    %v1708 = vunpack.c.l.b16 %v1484
    %v1709 = vunpack.c.h.b16 %v1484
    %v1710 = vunpack.c.l.b16 %v1485
    %v1711 = vunpack.c.h.b16 %v1485
    %v1712 = vunpack.c.l.b16 %v1486
    %v1713 = vunpack.c.h.b16 %v1486
    %v1714 = vunpack.c.l.b16 %v1487
    %v1715 = vunpack.c.h.b16 %v1487
    %v1716 = vunpack.c.l.b16 %v1488
    %v1717 = vunpack.c.h.b16 %v1488
    %v1718 = vunpack.c.l.b16 %v1489
    %v1719 = vunpack.c.h.b16 %v1489
    %v1720 = vunpack.c.l.b16 %v1490
    %v1721 = vunpack.c.h.b16 %v1490
    %v1722 = vunpack.c.l.b16 %v1491
    %v1723 = vunpack.c.h.b16 %v1491
    %v1724 = vunpack.c.l.b16 %v1492
    %v1725 = vunpack.c.h.b16 %v1492
    %v1726 = vunpack.c.l.b16 %v1493
    %v1727 = vunpack.c.h.b16 %v1493
    %v1728 = vunpack.c.l.b16 %v1494
    %v1729 = vunpack.c.h.b16 %v1494
    %v1730 = vunpack.c.l.b16 %v1495
    %v1731 = vunpack.c.h.b16 %v1495
    %v1732 = vunpack.c.l.b16 %v1496
    %v1733 = vunpack.c.h.b16 %v1496
    %v1734 = vunpack.c.l.b16 %v1497
    %v1735 = vunpack.c.h.b16 %v1497
    %v1736 = vunpack.c.l.b16 %v1498
    %v1737 = vunpack.c.h.b16 %v1498
    %v1738 = vunpack.c.l.b16 %v1499
    %v1739 = vunpack.c.h.b16 %v1499
    %v1740 = vunpack.c.l.b16 %v1500
    %v1741 = vunpack.c.h.b16 %v1500
    %v1742 = vunpack.c.l.b16 %v1501
    %v1743 = vunpack.c.h.b16 %v1501
    %v1744 = vunpack.c.l.b16 %v1502
    %v1745 = vunpack.c.h.b16 %v1502
    %v1746 = vunpack.c.l.b16 %v1503
    %v1747 = vunpack.c.h.b16 %v1503
    %v1748 = vunpack.c.l.b16 %v1504
    %v1749 = vunpack.c.h.b16 %v1504
    %v1750 = vunpack.c.l.b16 %v1505
    %v1751 = vunpack.c.h.b16 %v1505
    %v1752 = vunpack.c.l.b16 %v1506
    %v1753 = vunpack.c.h.b16 %v1506
    %v1754 = vunpack.c.l.b16 %v1507
    %v1755 = vunpack.c.h.b16 %v1507
    %v1756 = vunpack.c.l.b16 %v1508
    %v1757 = vunpack.c.h.b16 %v1508
    %v1758 = vunpack.c.l.b16 %v1509
    %v1759 = vunpack.c.h.b16 %v1509
    %v1760 = vunpack.c.l.b16 %v1510
    %v1761 = vunpack.c.h.b16 %v1510
    %v1762 = vunpack.c.l.b16 %v1511
    %v1763 = vunpack.c.h.b16 %v1511
    %v1764 = vpack.c.b16 %v1606, %v1604
    %v1765 = vpack.c.b16 %v1607, %v1605
    %v1766 = vpack.c.b16 %v1610, %v1608
    %v1767 = vpack.c.b16 %v1611, %v1609
    %v1768 = vpack.c.b16 %v1614, %v1612
    %v1769 = vpack.c.b16 %v1615, %v1613
    %v1770 = vpack.c.b16 %v1618, %v1616
    %v1771 = vpack.c.b16 %v1619, %v1617
    %v1772 = vpack.c.b16 %v1622, %v1620
    %v1773 = vpack.c.b16 %v1623, %v1621
    %v1774 = vpack.c.b16 %v1626, %v1624
    %v1775 = vpack.c.b16 %v1627, %v1625
    %v1776 = vpack.c.b16 %v1630, %v1628
    %v1777 = vpack.c.b16 %v1631, %v1629
    %v1778 = vpack.c.b16 %v1634, %v1632
    %v1779 = vpack.c.b16 %v1635, %v1633
    %v1780 = vpack.c.b16 %v1638, %v1636
    %v1781 = vpack.c.b16 %v1639, %v1637
    %v1782 = vpack.c.b16 %v1642, %v1640
    %v1783 = vpack.c.b16 %v1643, %v1641
    %v1784 = vpack.c.b16 %v1646, %v1644
    %v1785 = vpack.c.b16 %v1647, %v1645
    %v1786 = vpack.c.b16 %v1650, %v1648
    %v1787 = vpack.c.b16 %v1651, %v1649
    %v1788 = vpack.c.b16 %v1654, %v1652
    %v1789 = vpack.c.b16 %v1655, %v1653
    %v1790 = vpack.c.b16 %v1658, %v1656
    %v1791 = vpack.c.b16 %v1659, %v1657
    %v1792 = vpack.c.b16 %v1662, %v1660
    %v1793 = vpack.c.b16 %v1663, %v1661
    %v1794 = vpack.c.b16 %v1666, %v1664
    %v1795 = vpack.c.b16 %v1667, %v1665
    %v1796 = vpack.c.b16 %v1670, %v1668
    %v1797 = vpack.c.b16 %v1671, %v1669
    %v1798 = vpack.c.b16 %v1674, %v1672
    %v1799 = vpack.c.b16 %v1675, %v1673
    %v1800 = vpack.c.b16 %v1678, %v1676
    %v1801 = vpack.c.b16 %v1679, %v1677
    %v1802 = vpack.c.b16 %v1682, %v1680
    %v1803 = vpack.c.b16 %v1683, %v1681
    %v1804 = vpack.c.b16 %v1686, %v1684
    %v1805 = vpack.c.b16 %v1687, %v1685
    %v1806 = vpack.c.b16 %v1690, %v1688
    %v1807 = vpack.c.b16 %v1691, %v1689
    %v1808 = vpack.c.b16 %v1694, %v1692
    %v1809 = vpack.c.b16 %v1695, %v1693
    %v1810 = vpack.c.b16 %v1698, %v1696
    %v1811 = vpack.c.b16 %v1699, %v1697
    %v1812 = vpack.c.b16 %v1702, %v1700
    %v1813 = vpack.c.b16 %v1703, %v1701
    %v1814 = vpack.c.b16 %v1706, %v1704
    %v1815 = vpack.c.b16 %v1707, %v1705
    %v1816 = vpack.c.b16 %v1710, %v1708
    %v1817 = vpack.c.b16 %v1711, %v1709
    %v1818 = vpack.c.b16 %v1714, %v1712
    %v1819 = vpack.c.b16 %v1715, %v1713
    %v1820 = vpack.c.b16 %v1718, %v1716
    %v1821 = vpack.c.b16 %v1719, %v1717
    %v1822 = vpack.c.b16 %v1722, %v1720
    %v1823 = vpack.c.b16 %v1723, %v1721
    %v1824 = vpack.c.b16 %v1726, %v1724
    %v1825 = vpack.c.b16 %v1727, %v1725
    %v1826 = vpack.c.b16 %v1730, %v1728
    %v1827 = vpack.c.b16 %v1731, %v1729
    %v1828 = vpack.c.b16 %v1734, %v1732
    %v1829 = vpack.c.b16 %v1735, %v1733
    %v1830 = vpack.c.b16 %v1738, %v1736
    %v1831 = vpack.c.b16 %v1739, %v1737
    %v1832 = vpack.c.b16 %v1742, %v1740
    %v1833 = vpack.c.b16 %v1743, %v1741
    %v1834 = vpack.c.b16 %v1746, %v1744
    %v1835 = vpack.c.b16 %v1747, %v1745
    %v1836 = vpack.c.b16 %v1750, %v1748
    %v1837 = vpack.c.b16 %v1751, %v1749
    %v1838 = vpack.c.b16 %v1754, %v1752
    %v1839 = vpack.c.b16 %v1755, %v1753
    %v1840 = vpack.c.b16 %v1758, %v1756
    %v1841 = vpack.c.b16 %v1759, %v1757
    %v1842 = vpack.c.b16 %v1762, %v1760
    %v1843 = vpack.c.b16 %v1763, %v1761
    %1924 = vmatpush.bf16.msra.mxu0 %v1778
    %1925 = vmatpush.bf16.msra.mxu0 %v1776
    %1926 = vmatpush.bf16.msra.mxu0 %v1774
    %1927 = vmatpush.bf16.msra.mxu0 %v1772
    %1928 = vmatpush.bf16.msra.mxu0 %v1770
    %1929 = vmatpush.bf16.msra.mxu0 %v1768
    %1930 = vmatpush.bf16.msra.mxu0 %v1766
    %1931 = vmatpush.bf16.msra.mxu0 %v1764
    %1932 = vmatmul.bf16.gmra.mxu0 %v1514
    %v1933 = vpop.f32.mrf.mxu0
    %v1934 = vadd.f32 %v1520, %v1933
    %v1935 = vpop.f32.mrf.mxu0
    %v1936 = vadd.f32 %v1520, %v1935
    %1937 = vdwg.mxu0
    %1938 = vmatpush.bf16.msra.mxu0 %v1794
    %1939 = vmatpush.bf16.msra.mxu0 %v1792
    %1940 = vmatpush.bf16.msra.mxu0 %v1790
    %1941 = vmatpush.bf16.msra.mxu0 %v1788
    %1942 = vmatpush.bf16.msra.mxu0 %v1786
    %1943 = vmatpush.bf16.msra.mxu0 %v1784
    %1944 = vmatpush.bf16.msra.mxu0 %v1782
    %1945 = vmatpush.bf16.msra.mxu0 %v1780
    %1946 = vmatmul.bf16.gmra.mxu0 %v1515
    %v1947 = vpop.f32.mrf.mxu0
    %v1948 = vadd.f32 %v1934, %v1947
    %v1949 = vpop.f32.mrf.mxu0
    %v1950 = vadd.f32 %v1936, %v1949
    %1951 = vdwg.mxu0
    %1952 = vmatpush.bf16.msra.mxu0 %v1810
    %1953 = vmatpush.bf16.msra.mxu0 %v1808
    %1954 = vmatpush.bf16.msra.mxu0 %v1806
    %1955 = vmatpush.bf16.msra.mxu0 %v1804
    %1956 = vmatpush.bf16.msra.mxu0 %v1802
    %1957 = vmatpush.bf16.msra.mxu0 %v1800
    %1958 = vmatpush.bf16.msra.mxu0 %v1798
    %1959 = vmatpush.bf16.msra.mxu0 %v1796
    %1960 = vmatmul.bf16.gmra.mxu0 %v1516
    %v1961 = vpop.f32.mrf.mxu0
    %v1962 = vadd.f32 %v1948, %v1961
    %v1963 = vpop.f32.mrf.mxu0
    %v1964 = vadd.f32 %v1950, %v1963
    %1965 = vdwg.mxu0
    %1966 = vmatpush.bf16.msra.mxu0 %v1826
    %1967 = vmatpush.bf16.msra.mxu0 %v1824
    %1968 = vmatpush.bf16.msra.mxu0 %v1822
    %1969 = vmatpush.bf16.msra.mxu0 %v1820
    %1970 = vmatpush.bf16.msra.mxu0 %v1818
    %1971 = vmatpush.bf16.msra.mxu0 %v1816
    %1972 = vmatpush.bf16.msra.mxu0 %v1814
    %1973 = vmatpush.bf16.msra.mxu0 %v1812
    %1974 = vmatmul.bf16.gmra.mxu0 %v1517
    %v1975 = vpop.f32.mrf.mxu0
    %v1976 = vadd.f32 %v1962, %v1975
    %v1977 = vpop.f32.mrf.mxu0
    %v1978 = vadd.f32 %v1964, %v1977
    %1979 = vdwg.mxu0
    %1980 = vmatpush.bf16.msra.mxu0 %v1842
    %1981 = vmatpush.bf16.msra.mxu0 %v1840
    %1982 = vmatpush.bf16.msra.mxu0 %v1838
    %1983 = vmatpush.bf16.msra.mxu0 %v1836
    %1984 = vmatpush.bf16.msra.mxu0 %v1834
    %1985 = vmatpush.bf16.msra.mxu0 %v1832
    %1986 = vmatpush.bf16.msra.mxu0 %v1830
    %1987 = vmatpush.bf16.msra.mxu0 %v1828
    %1988 = vmatmul.bf16.gmra.mxu0 %v1518
    %v1989 = vpop.f32.mrf.mxu0
    %v1990 = vadd.f32 %v1976, %v1989
    %v1991 = vpop.f32.mrf.mxu0
    %v1992 = vadd.f32 %v1978, %v1991
    %1993 = vdwg.mxu0
    %1994 = vmatpush.bf16.msra.mxu0 %v1779
    %1995 = vmatpush.bf16.msra.mxu0 %v1777
    %1996 = vmatpush.bf16.msra.mxu0 %v1775
    %1997 = vmatpush.bf16.msra.mxu0 %v1773
    %1998 = vmatpush.bf16.msra.mxu0 %v1771
    %1999 = vmatpush.bf16.msra.mxu0 %v1769
    %2000 = vmatpush.bf16.msra.mxu0 %v1767
    %2001 = vmatpush.bf16.msra.mxu0 %v1765
    %2002 = vmatmul.bf16.gmra.mxu0 %v1514
    %v2003 = vpop.f32.mrf.mxu0
    %v2004 = vadd.f32 %v1521, %v2003
    %v2005 = vpop.f32.mrf.mxu0
    %v2006 = vadd.f32 %v1521, %v2005
    %2007 = vdwg.mxu0
    %2008 = vmatpush.bf16.msra.mxu0 %v1795
    %2009 = vmatpush.bf16.msra.mxu0 %v1793
    %2010 = vmatpush.bf16.msra.mxu0 %v1791
    %2011 = vmatpush.bf16.msra.mxu0 %v1789
    %2012 = vmatpush.bf16.msra.mxu0 %v1787
    %2013 = vmatpush.bf16.msra.mxu0 %v1785
    %2014 = vmatpush.bf16.msra.mxu0 %v1783
    %2015 = vmatpush.bf16.msra.mxu0 %v1781
    %2016 = vmatmul.bf16.gmra.mxu0 %v1515
    %v2017 = vpop.f32.mrf.mxu0
    %v2018 = vadd.f32 %v2004, %v2017
    %v2019 = vpop.f32.mrf.mxu0
    %v2020 = vadd.f32 %v2006, %v2019
    %2021 = vdwg.mxu0
    %2022 = vmatpush.bf16.msra.mxu0 %v1811
    %2023 = vmatpush.bf16.msra.mxu0 %v1809
    %2024 = vmatpush.bf16.msra.mxu0 %v1807
    %2025 = vmatpush.bf16.msra.mxu0 %v1805
    %2026 = vmatpush.bf16.msra.mxu0 %v1803
    %2027 = vmatpush.bf16.msra.mxu0 %v1801
    %2028 = vmatpush.bf16.msra.mxu0 %v1799
    %2029 = vmatpush.bf16.msra.mxu0 %v1797
    %2030 = vmatmul.bf16.gmra.mxu0 %v1516
    %v2031 = vpop.f32.mrf.mxu0
    %v2032 = vadd.f32 %v2018, %v2031
    %v2033 = vpop.f32.mrf.mxu0
    %v2034 = vadd.f32 %v2020, %v2033
    %2035 = vdwg.mxu0
    %2036 = vmatpush.bf16.msra.mxu0 %v1827
    %2037 = vmatpush.bf16.msra.mxu0 %v1825
    %2038 = vmatpush.bf16.msra.mxu0 %v1823
    %2039 = vmatpush.bf16.msra.mxu0 %v1821
    %2040 = vmatpush.bf16.msra.mxu0 %v1819
    %2041 = vmatpush.bf16.msra.mxu0 %v1817
    %2042 = vmatpush.bf16.msra.mxu0 %v1815
    %2043 = vmatpush.bf16.msra.mxu0 %v1813
    %2044 = vmatmul.bf16.gmra.mxu0 %v1517
    %v2045 = vpop.f32.mrf.mxu0
    %v2046 = vadd.f32 %v2032, %v2045
    %v2047 = vpop.f32.mrf.mxu0
    %v2048 = vadd.f32 %v2034, %v2047
    %2049 = vdwg.mxu0
    %2050 = vmatpush.bf16.msra.mxu0 %v1843
    %2051 = vmatpush.bf16.msra.mxu0 %v1841
    %2052 = vmatpush.bf16.msra.mxu0 %v1839
    %2053 = vmatpush.bf16.msra.mxu0 %v1837
    %2054 = vmatpush.bf16.msra.mxu0 %v1835
    %2055 = vmatpush.bf16.msra.mxu0 %v1833
    %2056 = vmatpush.bf16.msra.mxu0 %v1831
    %2057 = vmatpush.bf16.msra.mxu0 %v1829
    %2058 = vmatmul.bf16.gmra.mxu0 %v1518
    %v2059 = vpop.f32.mrf.mxu0
    %v2060 = vadd.f32 %v2046, %v2059
    %v2061 = vpop.f32.mrf.mxu0
    %v2062 = vadd.f32 %v2048, %v2061
    %2063 = vdwg.mxu0
    %v2064 = vmax.f32 %v1990, 0.0
    %v2065 = vmax.f32 %v2060, 0.0
    %v2066 = vmax.f32 %v1992, 0.0
    %v2067 = vmax.f32 %v2062, 0.0
    %v2068 = vld [vmem:[#allocation5 + $0x280] sm:$0xff]
    %v2069 = vld [vmem:[#allocation5 + $0x288] sm:$0xff]
    %v2070 = vld [vmem:[#allocation5 + $0x290] sm:$0xff]
    %v2071 = vld [vmem:[#allocation5 + $0x298] sm:$0xff]
    %v2072 = vld [vmem:[#allocation5 + $0x2a0] sm:$0xff]
    %v2073 = vld [vmem:[#allocation5 + $0x2a8] sm:$0xff]
    %v2074 = vld [vmem:[#allocation5 + $0x2b0] sm:$0xff]
    %v2075 = vld [vmem:[#allocation5 + $0x2b8] sm:$0xff]
    %v2076 = vld [vmem:[#allocation5 + $0x2c0] sm:$0xff]
    %v2077 = vld [vmem:[#allocation5 + $0x2c8] sm:$0xff]
    %v2078 = vld [vmem:[#allocation5 + $0x2d0] sm:$0xff]
    %v2079 = vld [vmem:[#allocation5 + $0x2d8] sm:$0xff]
    %v2080 = vld [vmem:[#allocation5 + $0x2e0] sm:$0xff]
    %v2081 = vld [vmem:[#allocation5 + $0x2e8] sm:$0xff]
    %v2082 = vld [vmem:[#allocation5 + $0x2f0] sm:$0xff]
    %v2083 = vld [vmem:[#allocation5 + $0x2f8] sm:$0xff]
    %v2084 = vld [vmem:[#allocation5 + $0x300] sm:$0xff]
    %v2085 = vld [vmem:[#allocation5 + $0x308] sm:$0xff]
    %v2086 = vld [vmem:[#allocation5 + $0x310] sm:$0xff]
    %v2087 = vld [vmem:[#allocation5 + $0x318] sm:$0xff]
    %v2088 = vld [vmem:[#allocation5 + $0x320] sm:$0xff]
    %v2089 = vld [vmem:[#allocation5 + $0x328] sm:$0xff]
    %v2090 = vld [vmem:[#allocation5 + $0x330] sm:$0xff]
    %v2091 = vld [vmem:[#allocation5 + $0x338] sm:$0xff]
    %v2092 = vld [vmem:[#allocation5 + $0x340] sm:$0xff]
    %v2093 = vld [vmem:[#allocation5 + $0x348] sm:$0xff]
    %v2094 = vld [vmem:[#allocation5 + $0x350] sm:$0xff]
    %v2095 = vld [vmem:[#allocation5 + $0x358] sm:$0xff]
    %v2096 = vld [vmem:[#allocation5 + $0x360] sm:$0xff]
    %v2097 = vld [vmem:[#allocation5 + $0x368] sm:$0xff]
    %v2098 = vld [vmem:[#allocation5 + $0x370] sm:$0xff]
    %v2099 = vld [vmem:[#allocation5 + $0x378] sm:$0xff]
    %s2100 = scalar_lea.vmem %s4, 2
    %v2101 = vld [vmem:[%s2100] ss:$8 sm:$0x3]
    %v2102 = vpack.c.bf16 %v2066, %v2064
    %v2103 = vpack.c.bf16 %v2067, %v2065
    %v2105 = vperm.slane %v2101, 0
    %v2106 = vperm.slane %v2101, 1
    %v2141 = vunpack.c.l.b16 %v2068
    %v2142 = vunpack.c.h.b16 %v2068
    %v2143 = vunpack.c.l.b16 %v2069
    %v2144 = vunpack.c.h.b16 %v2069
    %v2145 = vunpack.c.l.b16 %v2070
    %v2146 = vunpack.c.h.b16 %v2070
    %v2147 = vunpack.c.l.b16 %v2071
    %v2148 = vunpack.c.h.b16 %v2071
    %v2149 = vunpack.c.l.b16 %v2072
    %v2150 = vunpack.c.h.b16 %v2072
    %v2151 = vunpack.c.l.b16 %v2073
    %v2152 = vunpack.c.h.b16 %v2073
    %v2153 = vunpack.c.l.b16 %v2074
    %v2154 = vunpack.c.h.b16 %v2074
    %v2155 = vunpack.c.l.b16 %v2075
    %v2156 = vunpack.c.h.b16 %v2075
    %v2157 = vunpack.c.l.b16 %v2076
    %v2158 = vunpack.c.h.b16 %v2076
    %v2159 = vunpack.c.l.b16 %v2077
    %v2160 = vunpack.c.h.b16 %v2077
    %v2161 = vunpack.c.l.b16 %v2078
    %v2162 = vunpack.c.h.b16 %v2078
    %v2163 = vunpack.c.l.b16 %v2079
    %v2164 = vunpack.c.h.b16 %v2079
    %v2165 = vunpack.c.l.b16 %v2080
    %v2166 = vunpack.c.h.b16 %v2080
    %v2167 = vunpack.c.l.b16 %v2081
    %v2168 = vunpack.c.h.b16 %v2081
    %v2169 = vunpack.c.l.b16 %v2082
    %v2170 = vunpack.c.h.b16 %v2082
    %v2171 = vunpack.c.l.b16 %v2083
    %v2172 = vunpack.c.h.b16 %v2083
    %v2173 = vunpack.c.l.b16 %v2084
    %v2174 = vunpack.c.h.b16 %v2084
    %v2175 = vunpack.c.l.b16 %v2085
    %v2176 = vunpack.c.h.b16 %v2085
    %v2177 = vunpack.c.l.b16 %v2086
    %v2178 = vunpack.c.h.b16 %v2086
    %v2179 = vunpack.c.l.b16 %v2087
    %v2180 = vunpack.c.h.b16 %v2087
    %v2181 = vunpack.c.l.b16 %v2088
    %v2182 = vunpack.c.h.b16 %v2088
    %v2183 = vunpack.c.l.b16 %v2089
    %v2184 = vunpack.c.h.b16 %v2089
    %v2185 = vunpack.c.l.b16 %v2090
    %v2186 = vunpack.c.h.b16 %v2090
    %v2187 = vunpack.c.l.b16 %v2091
    %v2188 = vunpack.c.h.b16 %v2091
    %v2189 = vunpack.c.l.b16 %v2092
    %v2190 = vunpack.c.h.b16 %v2092
    %v2191 = vunpack.c.l.b16 %v2093
    %v2192 = vunpack.c.h.b16 %v2093
    %v2193 = vunpack.c.l.b16 %v2094
    %v2194 = vunpack.c.h.b16 %v2094
    %v2195 = vunpack.c.l.b16 %v2095
    %v2196 = vunpack.c.h.b16 %v2095
    %v2197 = vunpack.c.l.b16 %v2096
    %v2198 = vunpack.c.h.b16 %v2096
    %v2199 = vunpack.c.l.b16 %v2097
    %v2200 = vunpack.c.h.b16 %v2097
    %v2201 = vunpack.c.l.b16 %v2098
    %v2202 = vunpack.c.h.b16 %v2098
    %v2203 = vunpack.c.l.b16 %v2099
    %v2204 = vunpack.c.h.b16 %v2099
    %v2205 = vpack.c.b16 %v2143, %v2141
    %v2206 = vpack.c.b16 %v2144, %v2142
    %v2207 = vpack.c.b16 %v2147, %v2145
    %v2208 = vpack.c.b16 %v2148, %v2146
    %v2209 = vpack.c.b16 %v2151, %v2149
    %v2210 = vpack.c.b16 %v2152, %v2150
    %v2211 = vpack.c.b16 %v2155, %v2153
    %v2212 = vpack.c.b16 %v2156, %v2154
    %v2213 = vpack.c.b16 %v2159, %v2157
    %v2214 = vpack.c.b16 %v2160, %v2158
    %v2215 = vpack.c.b16 %v2163, %v2161
    %v2216 = vpack.c.b16 %v2164, %v2162
    %v2217 = vpack.c.b16 %v2167, %v2165
    %v2218 = vpack.c.b16 %v2168, %v2166
    %v2219 = vpack.c.b16 %v2171, %v2169
    %v2220 = vpack.c.b16 %v2172, %v2170
    %v2221 = vpack.c.b16 %v2175, %v2173
    %v2222 = vpack.c.b16 %v2176, %v2174
    %v2223 = vpack.c.b16 %v2179, %v2177
    %v2224 = vpack.c.b16 %v2180, %v2178
    %v2225 = vpack.c.b16 %v2183, %v2181
    %v2226 = vpack.c.b16 %v2184, %v2182
    %v2227 = vpack.c.b16 %v2187, %v2185
    %v2228 = vpack.c.b16 %v2188, %v2186
    %v2229 = vpack.c.b16 %v2191, %v2189
    %v2230 = vpack.c.b16 %v2192, %v2190
    %v2231 = vpack.c.b16 %v2195, %v2193
    %v2232 = vpack.c.b16 %v2196, %v2194
    %v2233 = vpack.c.b16 %v2199, %v2197
    %v2234 = vpack.c.b16 %v2200, %v2198
    %v2235 = vpack.c.b16 %v2203, %v2201
    %v2236 = vpack.c.b16 %v2204, %v2202
    %2269 = vmatpush.bf16.msra.mxu0 %v2219
    %2270 = vmatpush.bf16.msra.mxu0 %v2217
    %2271 = vmatpush.bf16.msra.mxu0 %v2215
    %2272 = vmatpush.bf16.msra.mxu0 %v2213
    %2273 = vmatpush.bf16.msra.mxu0 %v2211
    %2274 = vmatpush.bf16.msra.mxu0 %v2209
    %2275 = vmatpush.bf16.msra.mxu0 %v2207
    %2276 = vmatpush.bf16.msra.mxu0 %v2205
    %2277 = vmatmul.bf16.gmra.mxu0 %v2102
    %v2278 = vpop.f32.mrf.mxu0
    %v2279 = vadd.f32 %v2105, %v2278
    %v2280 = vpop.f32.mrf.mxu0
    %v2281 = vadd.f32 %v2105, %v2280
    %2282 = vdwg.mxu0
    %2283 = vmatpush.bf16.msra.mxu0 %v2235
    %2284 = vmatpush.bf16.msra.mxu0 %v2233
    %2285 = vmatpush.bf16.msra.mxu0 %v2231
    %2286 = vmatpush.bf16.msra.mxu0 %v2229
    %2287 = vmatpush.bf16.msra.mxu0 %v2227
    %2288 = vmatpush.bf16.msra.mxu0 %v2225
    %2289 = vmatpush.bf16.msra.mxu0 %v2223
    %2290 = vmatpush.bf16.msra.mxu0 %v2221
    %2291 = vmatmul.bf16.gmra.mxu0 %v2103
    %v2292 = vpop.f32.mrf.mxu0
    %v2293 = vadd.f32 %v2279, %v2292
    %v2294 = vpop.f32.mrf.mxu0
    %v2295 = vadd.f32 %v2281, %v2294
    %2296 = vdwg.mxu0
    %2297 = vmatpush.bf16.msra.mxu0 %v2220
    %2298 = vmatpush.bf16.msra.mxu0 %v2218
    %2299 = vmatpush.bf16.msra.mxu0 %v2216
    %2300 = vmatpush.bf16.msra.mxu0 %v2214
    %2301 = vmatpush.bf16.msra.mxu0 %v2212
    %2302 = vmatpush.bf16.msra.mxu0 %v2210
    %2303 = vmatpush.bf16.msra.mxu0 %v2208
    %2304 = vmatpush.bf16.msra.mxu0 %v2206
    %2305 = vmatmul.bf16.gmra.mxu0 %v2102
    %v2306 = vpop.f32.mrf.mxu0
    %v2307 = vadd.f32 %v2106, %v2306
    %v2308 = vpop.f32.mrf.mxu0
    %v2309 = vadd.f32 %v2106, %v2308
    %2310 = vdwg.mxu0
    %2311 = vmatpush.bf16.msra.mxu0 %v2236
    %2312 = vmatpush.bf16.msra.mxu0 %v2234
    %2313 = vmatpush.bf16.msra.mxu0 %v2232
    %2314 = vmatpush.bf16.msra.mxu0 %v2230
    %2315 = vmatpush.bf16.msra.mxu0 %v2228
    %2316 = vmatpush.bf16.msra.mxu0 %v2226
    %2317 = vmatpush.bf16.msra.mxu0 %v2224
    %2318 = vmatpush.bf16.msra.mxu0 %v2222
    %2319 = vmatmul.bf16.gmra.mxu0 %v2103
    %v2320 = vpop.f32.mrf.mxu0
    %v2321 = vadd.f32 %v2307, %v2320
    %v2322 = vpop.f32.mrf.mxu0
    %v2323 = vadd.f32 %v2309, %v2322
    %2324 = vdwg.mxu0
    %v2325 = vmax.f32 %v2293, 0.0
    %v2326 = vmax.f32 %v2321, 0.0
    %v2327 = vmax.f32 %v2295, 0.0
    %v2328 = vmax.f32 %v2323, 0.0
    %v2329 = vld [vmem:[#allocation7] sm:$0xf]
    %v2330 = vld [vmem:[#allocation7 + $0x4] sm:$0xf]
    %v2331 = vld [vmem:[#allocation7 + $0x8] sm:$0xf]
    %v2332 = vld [vmem:[#allocation7 + $0xc] sm:$0xf]
    %v2333 = vld [vmem:[#allocation7 + $0x10] sm:$0xf]
    %v2334 = vld [vmem:[#allocation7 + $0x14] sm:$0xf]
    %v2335 = vld [vmem:[#allocation7 + $0x18] sm:$0xf]
    %v2336 = vld [vmem:[#allocation7 + $0x1c] sm:$0xf]
    %v2337 = vld [vmem:[#allocation7 + $0x20] sm:$0xf]
    %v2338 = vld [vmem:[#allocation7 + $0x24] sm:$0xf]
    %v2339 = vld [vmem:[#allocation7 + $0x28] sm:$0xf]
    %v2340 = vld [vmem:[#allocation7 + $0x2c] sm:$0xf]
    %v2341 = vld [vmem:[#allocation7 + $0x30] sm:$0xf]
    %v2342 = vld [vmem:[#allocation7 + $0x34] sm:$0xf]
    %v2343 = vld [vmem:[#allocation7 + $0x38] sm:$0xf]
    %v2344 = vld [vmem:[#allocation7 + $0x3c] sm:$0xf]
    %v2345 = vld [vmem:[#allocation7 + $0x40] sm:$0xf]
    %v2346 = vld [vmem:[#allocation7 + $0x44] sm:$0xf]
    %v2347 = vld [vmem:[#allocation7 + $0x48] sm:$0xf]
    %v2348 = vld [vmem:[#allocation7 + $0x4c] sm:$0xf]
    %v2349 = vld [vmem:[#allocation7 + $0x50] sm:$0xf]
    %v2350 = vld [vmem:[#allocation7 + $0x54] sm:$0xf]
    %v2351 = vld [vmem:[#allocation7 + $0x58] sm:$0xf]
    %v2352 = vld [vmem:[#allocation7 + $0x5c] sm:$0xf]
    %v2353 = vld [vmem:[#allocation7 + $0x60] sm:$0xf]
    %v2354 = vld [vmem:[#allocation7 + $0x64] sm:$0xf]
    %v2355 = vld [vmem:[#allocation7 + $0x68] sm:$0xf]
    %v2356 = vld [vmem:[#allocation7 + $0x6c] sm:$0xf]
    %v2357 = vld [vmem:[#allocation7 + $0x70] sm:$0xf]
    %v2358 = vld [vmem:[#allocation7 + $0x74] sm:$0xf]
    %v2359 = vld [vmem:[#allocation7 + $0x78] sm:$0xf]
    %v2360 = vld [vmem:[#allocation7 + $0x7c] sm:$0xf]
    %v2361 = vld [vmem:[%s4 + $0x3] ss:$0 sm:$0xff]
    %v2362 = vpack.c.bf16 %v2327, %v2325
    %v2363 = vpack.c.bf16 %v2328, %v2326
    %v2396 = vunpack.c.l.b16 %v2329
    %v2397 = vunpack.c.l.b16 %v2330
    %v2398 = vunpack.c.l.b16 %v2331
    %v2399 = vunpack.c.l.b16 %v2332
    %v2400 = vunpack.c.l.b16 %v2333
    %v2401 = vunpack.c.l.b16 %v2334
    %v2402 = vunpack.c.l.b16 %v2335
    %v2403 = vunpack.c.l.b16 %v2336
    %v2404 = vunpack.c.l.b16 %v2337
    %v2405 = vunpack.c.l.b16 %v2338
    %v2406 = vunpack.c.l.b16 %v2339
    %v2407 = vunpack.c.l.b16 %v2340
    %v2408 = vunpack.c.l.b16 %v2341
    %v2409 = vunpack.c.l.b16 %v2342
    %v2410 = vunpack.c.l.b16 %v2343
    %v2411 = vunpack.c.l.b16 %v2344
    %v2412 = vunpack.c.l.b16 %v2345
    %v2413 = vunpack.c.l.b16 %v2346
    %v2414 = vunpack.c.l.b16 %v2347
    %v2415 = vunpack.c.l.b16 %v2348
    %v2416 = vunpack.c.l.b16 %v2349
    %v2417 = vunpack.c.l.b16 %v2350
    %v2418 = vunpack.c.l.b16 %v2351
    %v2419 = vunpack.c.l.b16 %v2352
    %v2420 = vunpack.c.l.b16 %v2353
    %v2421 = vunpack.c.l.b16 %v2354
    %v2422 = vunpack.c.l.b16 %v2355
    %v2423 = vunpack.c.l.b16 %v2356
    %v2424 = vunpack.c.l.b16 %v2357
    %v2425 = vunpack.c.l.b16 %v2358
    %v2426 = vunpack.c.l.b16 %v2359
    %v2427 = vunpack.c.l.b16 %v2360
    %v2428 = vpack.c.b16 %v2397, %v2396
    %v2429 = vpack.c.b16 %v2399, %v2398
    %v2430 = vpack.c.b16 %v2401, %v2400
    %v2431 = vpack.c.b16 %v2403, %v2402
    %v2432 = vpack.c.b16 %v2405, %v2404
    %v2433 = vpack.c.b16 %v2407, %v2406
    %v2434 = vpack.c.b16 %v2409, %v2408
    %v2435 = vpack.c.b16 %v2411, %v2410
    %v2436 = vpack.c.b16 %v2413, %v2412
    %v2437 = vpack.c.b16 %v2415, %v2414
    %v2438 = vpack.c.b16 %v2417, %v2416
    %v2439 = vpack.c.b16 %v2419, %v2418
    %v2440 = vpack.c.b16 %v2421, %v2420
    %v2441 = vpack.c.b16 %v2423, %v2422
    %v2442 = vpack.c.b16 %v2425, %v2424
    %v2443 = vpack.c.b16 %v2427, %v2426
    %2460 = vmatpush.bf16.msra.mxu0 %v2435
    %2461 = vmatpush.bf16.msra.mxu0 %v2434
    %2462 = vmatpush.bf16.msra.mxu0 %v2433
    %2463 = vmatpush.bf16.msra.mxu0 %v2432
    %2464 = vmatpush.bf16.msra.mxu0 %v2431
    %2465 = vmatpush.bf16.msra.mxu0 %v2430
    %2466 = vmatpush.bf16.msra.mxu0 %v2429
    %2467 = vmatpush.bf16.msra.mxu0 %v2428
    %2468 = vmatmul.bf16.gmra.mxu0 %v2362
    %v2469 = vpop.f32.mrf.mxu0
    %v2470 = vadd.f32 %v2361, %v2469
    %v2471 = vpop.f32.mrf.mxu0
    %v2472 = vadd.f32 %v2361, %v2471
    %2473 = vdwg.mxu0
    %2474 = vmatpush.bf16.msra.mxu0 %v2443
    %2475 = vmatpush.bf16.msra.mxu0 %v2442
    %2476 = vmatpush.bf16.msra.mxu0 %v2441
    %2477 = vmatpush.bf16.msra.mxu0 %v2440
    %2478 = vmatpush.bf16.msra.mxu0 %v2439
    %2479 = vmatpush.bf16.msra.mxu0 %v2438
    %2480 = vmatpush.bf16.msra.mxu0 %v2437
    %2481 = vmatpush.bf16.msra.mxu0 %v2436
    %2482 = vmatmul.bf16.gmra.mxu0 %v2363
    %v2483 = vpop.f32.mrf.mxu0
    %v2484 = vadd.f32 %v2470, %v2483
    %v2485 = vpop.f32.mrf.mxu0
    %v2486 = vadd.f32 %v2472, %v2485
    %2487 = vdwg.mxu0
    %v2488 = vmax.f32 %v2484, 0.0
    %v2489 = vmax.f32 %v2486, 0.0
    %v2490 = vld [vmem:[#allocation7 + $0x80] sm:$0xf]
    %v2491 = vld [vmem:[#allocation7 + $0x84] sm:$0xf]
    %v2492 = vld [vmem:[#allocation7 + $0x88] sm:$0xf]
    %v2493 = vld [vmem:[#allocation7 + $0x8c] sm:$0xf]
    %v2494 = vld [vmem:[#allocation7 + $0x90] sm:$0xf]
    %v2495 = vld [vmem:[#allocation7 + $0x94] sm:$0xf]
    %v2496 = vld [vmem:[#allocation7 + $0x98] sm:$0xf]
    %v2497 = vld [vmem:[#allocation7 + $0x9c] sm:$0xf]
    %v2498 = vld [vmem:[#allocation7 + $0xa0] sm:$0xf]
    %v2499 = vld [vmem:[#allocation7 + $0xa4] sm:$0xf]
    %v2500 = vld [vmem:[#allocation7 + $0xa8] sm:$0xf]
    %v2501 = vld [vmem:[#allocation7 + $0xac] sm:$0xf]
    %v2502 = vld [vmem:[#allocation7 + $0xb0] sm:$0xf]
    %v2503 = vld [vmem:[#allocation7 + $0xb4] sm:$0xf]
    %v2504 = vld [vmem:[#allocation7 + $0xb8] sm:$0xf]
    %v2505 = vld [vmem:[#allocation7 + $0xbc] sm:$0xf]
    %v2506 = vld [vmem:[%s4 + $0x4] ss:$0 sm:$0xff]
    %v2507 = vpack.c.bf16 %v2489, %v2488
    %v2524 = vunpack.c.l.b16 %v2490
    %v2525 = vunpack.c.l.b16 %v2491
    %v2526 = vunpack.c.l.b16 %v2492
    %v2527 = vunpack.c.l.b16 %v2493
    %v2528 = vunpack.c.l.b16 %v2494
    %v2529 = vunpack.c.l.b16 %v2495
    %v2530 = vunpack.c.l.b16 %v2496
    %v2531 = vunpack.c.l.b16 %v2497
    %v2532 = vunpack.c.l.b16 %v2498
    %v2533 = vunpack.c.l.b16 %v2499
    %v2534 = vunpack.c.l.b16 %v2500
    %v2535 = vunpack.c.l.b16 %v2501
    %v2536 = vunpack.c.l.b16 %v2502
    %v2537 = vunpack.c.l.b16 %v2503
    %v2538 = vunpack.c.l.b16 %v2504
    %v2539 = vunpack.c.l.b16 %v2505
    %v2540 = vpack.c.b16 %v2525, %v2524
    %v2541 = vpack.c.b16 %v2527, %v2526
    %v2542 = vpack.c.b16 %v2529, %v2528
    %v2543 = vpack.c.b16 %v2531, %v2530
    %v2544 = vpack.c.b16 %v2533, %v2532
    %v2545 = vpack.c.b16 %v2535, %v2534
    %v2546 = vpack.c.b16 %v2537, %v2536
    %v2547 = vpack.c.b16 %v2539, %v2538
    %2556 = vmatpush.bf16.msra.mxu0 %v2547
    %2557 = vmatpush.bf16.msra.mxu0 %v2546
    %2558 = vmatpush.bf16.msra.mxu0 %v2545
    %2559 = vmatpush.bf16.msra.mxu0 %v2544
    %2560 = vmatpush.bf16.msra.mxu0 %v2543
    %2561 = vmatpush.bf16.msra.mxu0 %v2542
    %2562 = vmatpush.bf16.msra.mxu0 %v2541
    %2563 = vmatpush.bf16.msra.mxu0 %v2540
    %2564 = vmatmul.bf16.gmra.mxu0 %v2507
    %v2565 = vpop.f32.mrf.mxu0
    %v2566 = vadd.f32 %v2506, %v2565
    %v2567 = vpop.f32.mrf.mxu0
    %v2568 = vadd.f32 %v2506, %v2567
    %2569 = vdwg.mxu0
    %v2570 = vmax.f32 %v2566, 0.0
    %v2571 = vmax.f32 %v2568, 0.0
    %v2572 = vld [vmem:[#allocation7 + $0xc0] sm:$0xf]
    %v2573 = vld [vmem:[#allocation7 + $0xc4] sm:$0xf]
    %v2574 = vld [vmem:[#allocation7 + $0xc8] sm:$0xf]
    %v2575 = vld [vmem:[#allocation7 + $0xcc] sm:$0xf]
    %v2576 = vld [vmem:[#allocation7 + $0xd0] sm:$0xf]
    %v2577 = vld [vmem:[#allocation7 + $0xd4] sm:$0xf]
    %v2578 = vld [vmem:[#allocation7 + $0xd8] sm:$0xf]
    %v2579 = vld [vmem:[#allocation7 + $0xdc] sm:$0xf]
    %v2580 = vld [vmem:[#allocation7 + $0xe0] sm:$0xf]
    %v2581 = vld [vmem:[#allocation7 + $0xe4] sm:$0xf]
    %v2582 = vld [vmem:[#allocation7 + $0xe8] sm:$0xf]
    %v2583 = vld [vmem:[#allocation7 + $0xec] sm:$0xf]
    %v2584 = vld [vmem:[#allocation7 + $0xf0] sm:$0xf]
    %v2585 = vld [vmem:[#allocation7 + $0xf4] sm:$0xf]
    %v2586 = vld [vmem:[#allocation7 + $0xf8] sm:$0xf]
    %v2587 = vld [vmem:[#allocation7 + $0xfc] sm:$0xf]
    %v2588 = vld [vmem:[%s4 + $0x5] ss:$0 sm:$0xff]
    %v2589 = vpack.c.bf16 %v2571, %v2570
    %v2606 = vunpack.c.l.b16 %v2572
    %v2607 = vunpack.c.l.b16 %v2573
    %v2608 = vunpack.c.l.b16 %v2574
    %v2609 = vunpack.c.l.b16 %v2575
    %v2610 = vunpack.c.l.b16 %v2576
    %v2611 = vunpack.c.l.b16 %v2577
    %v2612 = vunpack.c.l.b16 %v2578
    %v2613 = vunpack.c.l.b16 %v2579
    %v2614 = vunpack.c.l.b16 %v2580
    %v2615 = vunpack.c.l.b16 %v2581
    %v2616 = vunpack.c.l.b16 %v2582
    %v2617 = vunpack.c.l.b16 %v2583
    %v2618 = vunpack.c.l.b16 %v2584
    %v2619 = vunpack.c.l.b16 %v2585
    %v2620 = vunpack.c.l.b16 %v2586
    %v2621 = vunpack.c.l.b16 %v2587
    %v2622 = vpack.c.b16 %v2607, %v2606
    %v2623 = vpack.c.b16 %v2609, %v2608
    %v2624 = vpack.c.b16 %v2611, %v2610
    %v2625 = vpack.c.b16 %v2613, %v2612
    %v2626 = vpack.c.b16 %v2615, %v2614
    %v2627 = vpack.c.b16 %v2617, %v2616
    %v2628 = vpack.c.b16 %v2619, %v2618
    %v2629 = vpack.c.b16 %v2621, %v2620
    %2638 = vmatpush.bf16.msra.mxu0 %v2629
    %2639 = vmatpush.bf16.msra.mxu0 %v2628
    %2640 = vmatpush.bf16.msra.mxu0 %v2627
    %2641 = vmatpush.bf16.msra.mxu0 %v2626
    %2642 = vmatpush.bf16.msra.mxu0 %v2625
    %2643 = vmatpush.bf16.msra.mxu0 %v2624
    %2644 = vmatpush.bf16.msra.mxu0 %v2623
    %2645 = vmatpush.bf16.msra.mxu0 %v2622
    %2646 = vmatmul.bf16.gmra.mxu0 %v2589
    %v2647 = vpop.f32.mrf.mxu0
    %v2648 = vadd.f32 %v2588, %v2647
    %v2649 = vpop.f32.mrf.mxu0
    %v2650 = vadd.f32 %v2588, %v2649
    %2651 = vdwg.mxu0
    %v2652 = vld [vmem:[#allocation7 + $0x100] sm:$0xf]
    %v2653 = vld [vmem:[#allocation7 + $0x104] sm:$0xf]
    %v2654 = vld [vmem:[#allocation7 + $0x108] sm:$0xf]
    %v2655 = vld [vmem:[#allocation7 + $0x10c] sm:$0xf]
    %v2656 = vld [vmem:[#allocation7 + $0x110] sm:$0xf]
    %v2657 = vld [vmem:[#allocation7 + $0x114] sm:$0xf]
    %v2658 = vld [vmem:[#allocation7 + $0x118] sm:$0xf]
    %v2659 = vld [vmem:[#allocation7 + $0x11c] sm:$0xf]
    %v2660 = vld [vmem:[#allocation7 + $0x120] sm:$0xf]
    %v2661 = vld [vmem:[#allocation7 + $0x124] sm:$0xf]
    %v2662 = vld [vmem:[#allocation7 + $0x128] sm:$0xf]
    %v2663 = vld [vmem:[#allocation7 + $0x12c] sm:$0xf]
    %v2664 = vld [vmem:[#allocation7 + $0x130] sm:$0xf]
    %v2665 = vld [vmem:[#allocation7 + $0x134] sm:$0xf]
    %v2666 = vld [vmem:[#allocation7 + $0x138] sm:$0xf]
    %v2667 = vld [vmem:[#allocation7 + $0x13c] sm:$0xf]
    %v2668 = vld [vmem:[%s4 + $0x6] ss:$0 sm:$0xff]
    %v2669 = vpack.c.bf16 %v2650, %v2648
    %v2686 = vunpack.c.l.b16 %v2652
    %v2687 = vunpack.c.l.b16 %v2653
    %v2688 = vunpack.c.l.b16 %v2654
    %v2689 = vunpack.c.l.b16 %v2655
    %v2690 = vunpack.c.l.b16 %v2656
    %v2691 = vunpack.c.l.b16 %v2657
    %v2692 = vunpack.c.l.b16 %v2658
    %v2693 = vunpack.c.l.b16 %v2659
    %v2694 = vunpack.c.l.b16 %v2660
    %v2695 = vunpack.c.l.b16 %v2661
    %v2696 = vunpack.c.l.b16 %v2662
    %v2697 = vunpack.c.l.b16 %v2663
    %v2698 = vunpack.c.l.b16 %v2664
    %v2699 = vunpack.c.l.b16 %v2665
    %v2700 = vunpack.c.l.b16 %v2666
    %v2701 = vunpack.c.l.b16 %v2667
    %v2702 = vpack.c.b16 %v2687, %v2686
    %v2703 = vpack.c.b16 %v2689, %v2688
    %v2704 = vpack.c.b16 %v2691, %v2690
    %v2705 = vpack.c.b16 %v2693, %v2692
    %v2706 = vpack.c.b16 %v2695, %v2694
    %v2707 = vpack.c.b16 %v2697, %v2696
    %v2708 = vpack.c.b16 %v2699, %v2698
    %v2709 = vpack.c.b16 %v2701, %v2700
    %2718 = vmatpush.bf16.msra.mxu0 %v2709
    %2719 = vmatpush.bf16.msra.mxu0 %v2708
    %2720 = vmatpush.bf16.msra.mxu0 %v2707
    %2721 = vmatpush.bf16.msra.mxu0 %v2706
    %2722 = vmatpush.bf16.msra.mxu0 %v2705
    %2723 = vmatpush.bf16.msra.mxu0 %v2704
    %2724 = vmatpush.bf16.msra.mxu0 %v2703
    %2725 = vmatpush.bf16.msra.mxu0 %v2702
    %2726 = vmatmul.bf16.gmra.mxu0 %v2669
    %v2727 = vpop.f32.mrf.mxu0
    %v2728 = vadd.f32 %v2668, %v2727
    %v2729 = vpop.f32.mrf.mxu0
    %v2730 = vadd.f32 %v2668, %v2729
    %2731 = vdwg.mxu0
    %v2732 = vmax.f32 %v2728, 0.0
    %v2733 = vmax.f32 %v2730, 0.0
    %v2734 = vld [vmem:[#allocation7 + $0x140] sm:$0xf]
    %v2735 = vld [vmem:[#allocation7 + $0x144] sm:$0xf]
    %v2736 = vld [vmem:[#allocation7 + $0x148] sm:$0xf]
    %v2737 = vld [vmem:[#allocation7 + $0x14c] sm:$0xf]
    %v2738 = vld [vmem:[#allocation7 + $0x150] sm:$0xf]
    %v2739 = vld [vmem:[#allocation7 + $0x154] sm:$0xf]
    %v2740 = vld [vmem:[#allocation7 + $0x158] sm:$0xf]
    %v2741 = vld [vmem:[#allocation7 + $0x15c] sm:$0xf]
    %v2742 = vld [vmem:[#allocation7 + $0x160] sm:$0xf]
    %v2743 = vld [vmem:[#allocation7 + $0x164] sm:$0xf]
    %v2744 = vld [vmem:[#allocation7 + $0x168] sm:$0xf]
    %v2745 = vld [vmem:[#allocation7 + $0x16c] sm:$0xf]
    %v2746 = vld [vmem:[#allocation7 + $0x170] sm:$0xf]
    %v2747 = vld [vmem:[#allocation7 + $0x174] sm:$0xf]
    %v2748 = vld [vmem:[#allocation7 + $0x178] sm:$0xf]
    %v2749 = vld [vmem:[#allocation7 + $0x17c] sm:$0xf]
    %v2750 = vld [vmem:[%s4 + $0x7] ss:$0 sm:$0xff]
    %v2751 = vpack.c.bf16 %v2733, %v2732
    %v2768 = vunpack.c.l.b16 %v2734
    %v2769 = vunpack.c.l.b16 %v2735
    %v2770 = vunpack.c.l.b16 %v2736
    %v2771 = vunpack.c.l.b16 %v2737
    %v2772 = vunpack.c.l.b16 %v2738
    %v2773 = vunpack.c.l.b16 %v2739
    %v2774 = vunpack.c.l.b16 %v2740
    %v2775 = vunpack.c.l.b16 %v2741
    %v2776 = vunpack.c.l.b16 %v2742
    %v2777 = vunpack.c.l.b16 %v2743
    %v2778 = vunpack.c.l.b16 %v2744
    %v2779 = vunpack.c.l.b16 %v2745
    %v2780 = vunpack.c.l.b16 %v2746
    %v2781 = vunpack.c.l.b16 %v2747
    %v2782 = vunpack.c.l.b16 %v2748
    %v2783 = vunpack.c.l.b16 %v2749
    %v2784 = vpack.c.b16 %v2769, %v2768
    %v2785 = vpack.c.b16 %v2771, %v2770
    %v2786 = vpack.c.b16 %v2773, %v2772
    %v2787 = vpack.c.b16 %v2775, %v2774
    %v2788 = vpack.c.b16 %v2777, %v2776
    %v2789 = vpack.c.b16 %v2779, %v2778
    %v2790 = vpack.c.b16 %v2781, %v2780
    %v2791 = vpack.c.b16 %v2783, %v2782
    %2800 = vmatpush.bf16.msra.mxu0 %v2791
    %2801 = vmatpush.bf16.msra.mxu0 %v2790
    %2802 = vmatpush.bf16.msra.mxu0 %v2789
    %2803 = vmatpush.bf16.msra.mxu0 %v2788
    %2804 = vmatpush.bf16.msra.mxu0 %v2787
    %2805 = vmatpush.bf16.msra.mxu0 %v2786
    %2806 = vmatpush.bf16.msra.mxu0 %v2785
    %2807 = vmatpush.bf16.msra.mxu0 %v2784
    %2808 = vmatmul.bf16.gmra.mxu0 %v2751
    %v2809 = vpop.f32.mrf.mxu0
    %v2810 = vadd.f32 %v2750, %v2809
    %v2811 = vpop.f32.mrf.mxu0
    %v2812 = vadd.f32 %v2750, %v2811
    %2813 = vdwg.mxu0
    %v2814 = vmax.f32 %v2810, 0.0
    %v2815 = vmax.f32 %v2812, 0.0
    %v2816 = vld [vmem:[#allocation7 + $0x180] sm:$0xf]
    %v2817 = vld [vmem:[#allocation7 + $0x184] sm:$0xf]
    %v2818 = vld [vmem:[#allocation7 + $0x188] sm:$0xf]
    %v2819 = vld [vmem:[#allocation7 + $0x18c] sm:$0xf]
    %v2820 = vld [vmem:[#allocation7 + $0x190] sm:$0xf]
    %v2821 = vld [vmem:[#allocation7 + $0x194] sm:$0xf]
    %v2822 = vld [vmem:[#allocation7 + $0x198] sm:$0xf]
    %v2823 = vld [vmem:[#allocation7 + $0x19c] sm:$0xf]
    %v2824 = vld [vmem:[#allocation7 + $0x1a0] sm:$0xf]
    %v2825 = vld [vmem:[#allocation7 + $0x1a4] sm:$0xf]
    %v2826 = vld [vmem:[#allocation7 + $0x1a8] sm:$0xf]
    %v2827 = vld [vmem:[#allocation7 + $0x1ac] sm:$0xf]
    %v2828 = vld [vmem:[#allocation7 + $0x1b0] sm:$0xf]
    %v2829 = vld [vmem:[#allocation7 + $0x1b4] sm:$0xf]
    %v2830 = vld [vmem:[#allocation7 + $0x1b8] sm:$0xf]
    %v2831 = vld [vmem:[#allocation7 + $0x1bc] sm:$0xf]
    %v2832 = vld [vmem:[%s4 + $0x28] ss:$0 sm:$0xff]
    %v2833 = vpack.c.bf16 %v2815, %v2814
    %v2850 = vunpack.c.l.b16 %v2816
    %v2851 = vunpack.c.l.b16 %v2817
    %v2852 = vunpack.c.l.b16 %v2818
    %v2853 = vunpack.c.l.b16 %v2819
    %v2854 = vunpack.c.l.b16 %v2820
    %v2855 = vunpack.c.l.b16 %v2821
    %v2856 = vunpack.c.l.b16 %v2822
    %v2857 = vunpack.c.l.b16 %v2823
    %v2858 = vunpack.c.l.b16 %v2824
    %v2859 = vunpack.c.l.b16 %v2825
    %v2860 = vunpack.c.l.b16 %v2826
    %v2861 = vunpack.c.l.b16 %v2827
    %v2862 = vunpack.c.l.b16 %v2828
    %v2863 = vunpack.c.l.b16 %v2829
    %v2864 = vunpack.c.l.b16 %v2830
    %v2865 = vunpack.c.l.b16 %v2831
    %v2866 = vpack.c.b16 %v2851, %v2850
    %v2867 = vpack.c.b16 %v2853, %v2852
    %v2868 = vpack.c.b16 %v2855, %v2854
    %v2869 = vpack.c.b16 %v2857, %v2856
    %v2870 = vpack.c.b16 %v2859, %v2858
    %v2871 = vpack.c.b16 %v2861, %v2860
    %v2872 = vpack.c.b16 %v2863, %v2862
    %v2873 = vpack.c.b16 %v2865, %v2864
    %2882 = vmatpush.bf16.msra.mxu0 %v2873
    %2883 = vmatpush.bf16.msra.mxu0 %v2872
    %2884 = vmatpush.bf16.msra.mxu0 %v2871
    %2885 = vmatpush.bf16.msra.mxu0 %v2870
    %2886 = vmatpush.bf16.msra.mxu0 %v2869
    %2887 = vmatpush.bf16.msra.mxu0 %v2868
    %2888 = vmatpush.bf16.msra.mxu0 %v2867
    %2889 = vmatpush.bf16.msra.mxu0 %v2866
    %2890 = vmatmul.bf16.gmra.mxu0 %v2833
    %v2891 = vpop.f32.mrf.mxu0
    %v2892 = vadd.f32 %v2832, %v2891
    %v2893 = vpop.f32.mrf.mxu0
    %v2894 = vadd.f32 %v2832, %v2893
    %2895 = vdwg.mxu0
    %v2896 = vmax.f32 %v2892, 0.0
    %v2897 = vmax.f32 %v2894, 0.0
    %v2898 = vld [vmem:[#allocation7 + $0x1c0] sm:$0xf]
    %v2899 = vld [vmem:[#allocation7 + $0x1c4] sm:$0xf]
    %v2900 = vld [vmem:[#allocation7 + $0x1c8] sm:$0xf]
    %v2901 = vld [vmem:[#allocation7 + $0x1cc] sm:$0xf]
    %v2902 = vld [vmem:[#allocation7 + $0x1d0] sm:$0xf]
    %v2903 = vld [vmem:[#allocation7 + $0x1d4] sm:$0xf]
    %v2904 = vld [vmem:[#allocation7 + $0x1d8] sm:$0xf]
    %v2905 = vld [vmem:[#allocation7 + $0x1dc] sm:$0xf]
    %v2906 = vld [vmem:[#allocation7 + $0x1e0] sm:$0xf]
    %v2907 = vld [vmem:[#allocation7 + $0x1e4] sm:$0xf]
    %v2908 = vld [vmem:[#allocation7 + $0x1e8] sm:$0xf]
    %v2909 = vld [vmem:[#allocation7 + $0x1ec] sm:$0xf]
    %v2910 = vld [vmem:[#allocation7 + $0x1f0] sm:$0xf]
    %v2911 = vld [vmem:[#allocation7 + $0x1f4] sm:$0xf]
    %v2912 = vld [vmem:[#allocation7 + $0x1f8] sm:$0xf]
    %v2913 = vld [vmem:[#allocation7 + $0x1fc] sm:$0xf]
    %v2914 = vld [vmem:[%s4 + $0x29] ss:$0 sm:$0xff]
    %v2915 = vpack.c.bf16 %v2897, %v2896
    %v2932 = vunpack.c.l.b16 %v2898
    %v2933 = vunpack.c.l.b16 %v2899
    %v2934 = vunpack.c.l.b16 %v2900
    %v2935 = vunpack.c.l.b16 %v2901
    %v2936 = vunpack.c.l.b16 %v2902
    %v2937 = vunpack.c.l.b16 %v2903
    %v2938 = vunpack.c.l.b16 %v2904
    %v2939 = vunpack.c.l.b16 %v2905
    %v2940 = vunpack.c.l.b16 %v2906
    %v2941 = vunpack.c.l.b16 %v2907
    %v2942 = vunpack.c.l.b16 %v2908
    %v2943 = vunpack.c.l.b16 %v2909
    %v2944 = vunpack.c.l.b16 %v2910
    %v2945 = vunpack.c.l.b16 %v2911
    %v2946 = vunpack.c.l.b16 %v2912
    %v2947 = vunpack.c.l.b16 %v2913
    %v2948 = vpack.c.b16 %v2933, %v2932
    %v2949 = vpack.c.b16 %v2935, %v2934
    %v2950 = vpack.c.b16 %v2937, %v2936
    %v2951 = vpack.c.b16 %v2939, %v2938
    %v2952 = vpack.c.b16 %v2941, %v2940
    %v2953 = vpack.c.b16 %v2943, %v2942
    %v2954 = vpack.c.b16 %v2945, %v2944
    %v2955 = vpack.c.b16 %v2947, %v2946
    %2964 = vmatpush.bf16.msra.mxu0 %v2955
    %2965 = vmatpush.bf16.msra.mxu0 %v2954
    %2966 = vmatpush.bf16.msra.mxu0 %v2953
    %2967 = vmatpush.bf16.msra.mxu0 %v2952
    %2968 = vmatpush.bf16.msra.mxu0 %v2951
    %2969 = vmatpush.bf16.msra.mxu0 %v2950
    %2970 = vmatpush.bf16.msra.mxu0 %v2949
    %2971 = vmatpush.bf16.msra.mxu0 %v2948
    %2972 = vmatmul.bf16.gmra.mxu0 %v2915
    %v2973 = vpop.f32.mrf.mxu0
    %v2974 = vadd.f32 %v2914, %v2973
    %v2975 = vpop.f32.mrf.mxu0
    %v2976 = vadd.f32 %v2914, %v2975
    %2977 = vdwg.mxu0
    %v2978 = vadd.f32 %v2648, %v2974
    %v2979 = vadd.f32 %v2650, %v2976
    %2980 = vst [vmem:[%s5] sm:$0xff] %v2978
    %2981 = vst [vmem:[%s5 + $0x8] sm:$0xff] %v2979
    // Predicated region
    $region34: #{deep_fc_forward.1} parent=1 // pred_check
      _
    $region35: #{deep_fc_forward.1} parent=1 // pred_check_branch
      %2983 = sbr.rel (0) target = $region37
    $region36: #{deep_fc_forward.1} parent=1 // pred_region
      _
    $region37: #{deep_fc_forward.1} parent=1 // pred_fallthru
      _
    // Predicated region
    $region38: #{deep_fc_forward.1} parent=1 // pred_check
      _
    $region39: #{deep_fc_forward.1} parent=1 // pred_check_branch
      %2985 = sbr.rel (0) target = $region41
    $region40: #{deep_fc_forward.1} parent=1 // pred_region
      _
    $region41: #{deep_fc_forward.1} parent=1 // pred_fallthru
      _
    %2986 = vsyncpa [#allocation4], 1
    %2987 = vsyncpa [#allocation6], 1

</llo_original>
